<compile_context>
chip_gen: v7x
topology: tpu7x:2x2x1
jax: 0.10.0
libtpu: 0.0.40
codegen_flags: <defaults>
</compile_context>

<pallas_src>
from functools import partial

import jax
import jax.numpy as jnp
from jax.experimental import pallas as pl
from jax.experimental.pallas import tpu as pltpu


def _vicreg_kernel(x1_ref, x2_ref, out_ref, g1_ref, g2_ref, stat_ref,
                   *, sim_coef, std_coef, cov_coef, n, d, dp):
    i = pl.program_id(0)

    @pl.when(i == 0)
    def _init():
        g1_ref[...] = jnp.zeros_like(g1_ref)
        g2_ref[...] = jnp.zeros_like(g2_ref)
        stat_ref[...] = jnp.zeros_like(stat_ref)

    x1 = x1_ref[...]
    x2 = x2_ref[...]
    # Elementwise stats in f32 (v5e VPU has no bf16); the MXU gets native dtype.
    x1f = x1.astype(jnp.float32)
    x2f = x2.astype(jnp.float32)
    diff = x1f - x2f

    s1 = jnp.sum(x1f, axis=0, keepdims=True)            # (1, Dp)
    s2 = jnp.sum(x2f, axis=0, keepdims=True)            # (1, Dp)
    dsq = jnp.sum(diff * diff, axis=0, keepdims=True)   # (1, Dp)

    # Merge the three (1, Dp) statistics into rows 0..2 of one (8, Dp) scratch
    # with a single full-sublane RMW (instead of three masked sub-sublane
    # stores) -- helps most on v5e's single vst slot.
    row = jax.lax.broadcasted_iota(jnp.int32, (8, dp), 0)
    upd = (jnp.where(row == 0, s1, 0.0)
           + jnp.where(row == 1, s2, 0.0)
           + jnp.where(row == 2, dsq, 0.0))
    stat_ref[...] += upd

    # Gram matrices: contract the batch axis directly -> MXU transposed-LHS
    # mode; no explicit (TN, Dp) transpose of the tile is materialized
    # (verified on the lowered MLIR via pl.lower_as_mlir during development).
    dn = (((0,), (0,)), ((), ()))
    g1_ref[...] += jax.lax.dot_general(x1, x1, dimension_numbers=dn,
                                       preferred_element_type=jnp.float32)
    g2_ref[...] += jax.lax.dot_general(x2, x2, dimension_numbers=dn,
                                       preferred_element_type=jnp.float32)

    @pl.when(i == pl.num_programs(0) - 1)
    def _finalize():
        inv_n = jnp.float32(1.0 / n)
        inv_nm1 = jnp.float32(1.0 / (n - 1))
        inv_d = jnp.float32(1.0 / d)

        col = jax.lax.broadcasted_iota(jnp.int32, (1, dp), 1)
        col_mask = (col < d).astype(jnp.float32)   # 1 on real columns, 0 on padding

        strip = 128
        n_strips = dp // strip
        rows_l = jax.lax.broadcasted_iota(jnp.int32, (strip, dp), 0)
        cols_l = jax.lax.broadcasted_iota(jnp.int32, (strip, dp), 1)

        def view_terms(g_ref, s):
            # Statically-unrolled pass over G in (128, Dp) row strips: extracts
            # diag(G), sum(G^2) and s @ G without materializing any (Dp, Dp)
            # temporary (peak-VMEM fix for v7x; also frees headroom elsewhere).
            diag = jnp.zeros((1, dp), jnp.float32)
            sum_g2 = jnp.zeros((1, 1), jnp.float32)
            sg = jnp.zeros((1, dp), jnp.float32)
            for k in range(n_strips):
                r0 = k * strip
                gs = g_ref[r0:r0 + strip, :]                    # (strip, Dp) f32
                diag = diag + jnp.sum(
                    jnp.where((rows_l + r0) == cols_l, gs, 0.0),
                    axis=0, keepdims=True)
                sum_g2 = sum_g2 + jnp.sum(gs * gs, keepdims=True)
                sg = sg + jnp.dot(s[:, r0:r0 + strip], gs,
                                  preferred_element_type=jnp.float32)

            # Per-feature unbiased variance == diag(cov); padded columns -> 0.
            var = (diag - s * s * inv_n) * inv_nm1
            std = jnp.sqrt(var + jnp.float32(1e-4))
            hinge = jnp.maximum(jnp.float32(1.0) - std, jnp.float32(0.0))
            std_term = jnp.sum(hinge * col_mask) * inv_d

            # sum(cov^2) with cov = (G - s^T s / N)/(N-1), expanded so no
            # (Dp, Dp) eye mask or outer-product temporary is needed:
            #   sum((G - S/N)^2) = sum(G^2) - (2/N) s G s^T + (1/N^2)(sum s^2)^2
            s_g_s = jnp.sum(sg * s)
            sum_s2 = jnp.sum(s * s)
            sum_cov2 = (sum_g2[0, 0] - 2.0 * inv_n * s_g_s
                        + inv_n * inv_n * sum_s2 * sum_s2) * inv_nm1 * inv_nm1
            cov_term = (sum_cov2 - jnp.sum(var * var)) * inv_d
            return std_term, cov_term

        std1, cov1 = view_terms(g1_ref, stat_ref[0:1, :])
        std2, cov2 = view_terms(g2_ref, stat_ref[1:2, :])

        sim = jnp.sum(stat_ref[2:3, :]) * jnp.float32(1.0 / (n * d))
        loss = (sim * jnp.float32(sim_coef)
                + (std1 + std2) * jnp.float32(0.5 * std_coef)
                + (cov1 + cov2) * jnp.float32(0.5 * cov_coef))
        out_ref[0, 0] = loss


def _round_up(x, m):
    return (x + m - 1) // m * m


def _round_down(x, m):
    return (x // m) * m


def vicreg_loss(x1, x2, sim_coef=25.0, std_coef=25.0, cov_coef=1.0, *,
                tile_n=None):
    assert x1.shape == x2.shape and x1.ndim == 2, "expects (num_nodes, z_dim)"
    n, d = x1.shape
    assert n >= 2, "VICReg needs >= 2 samples (unbiased var/cov divides by N-1)"

    itemsize = jnp.dtype(x1.dtype).itemsize
    # TODO(synk): 8-bit dtypes would need 32-row sublane packing; unsupported here.
    assert itemsize >= 2, "int8/fp8 inputs unsupported"
    sublane = 16 if itemsize == 2 else 8
    dp = _round_up(d, 128)                               # lane-dense feature axis

    # ---- device-aware VMEM budget (v7x: 64 MiB/TC, v5e/v6e: 128 MiB) -------
    try:
        vmem_cap = int(getattr(pltpu.get_tpu_info(), "vmem_capacity_bytes",
                               128 << 20))
    except Exception:
        vmem_cap = 128 << 20
    vmem_cap = int(min(vmem_cap - (8 << 20), 100 << 20))  # ~56 MiB v7x, 100 MiB v5e/v6e

    gram_bytes = 2 * dp * dp * 4            # two fp32 (Dp, Dp) Gram accumulators
    stat_bytes = 8 * dp * 4                 # merged (8, Dp) running sums
    finalize_bytes = 4 * 128 * dp * 4       # (128, Dp) strip temporaries at finalize
    fixed_bytes = gram_bytes + stat_bytes + finalize_bytes + (2 << 20)
    assert fixed_bytes < vmem_cap, "z_dim too large for single-block Gram accumulation"
    # TODO(synk): feature-blocked (j, k) grid over G for z_dim beyond a few K.

    # Batch tile: as large as the generation's VMEM budget allows (amortizes
    # the per-step (Dp, Dp) accumulator RMW and the ~0.35us/step pipeline
    # overhead; default target 2048 on v5e/v6e, automatically smaller on v7x),
    # then balanced against N so the grid adds minimal zero padding.
    n_buf = 3 if dp < 256 else 2            # deeper buffering in the mem-bound regime
    tn_budget = (vmem_cap - fixed_bytes) // (2 * n_buf * dp * itemsize)
    tn_budget = max(_round_down(int(tn_budget), sublane), sublane)

    desired = 2048 if tile_n is None else int(tile_n)
    desired = max(_round_up(desired, sublane), sublane)
    desired = min(desired, tn_budget)

    n_steps = int(pl.cdiv(n, desired))
    tn = _round_up(int(pl.cdiv(n, n_steps)), sublane)    # balanced; tn <= desired
    npad = n_steps * tn

    if (npad, dp) != (n, d):
        # Zero rows/cols contribute 0 to every accumulated statistic; true n, d
        # are used for all divisors and padded columns are masked at finalize.
        pad = ((0, npad - n), (0, dp - d))
        x1 = jnp.pad(x1, pad)
        x2 = jnp.pad(x2, pad)

    # Triple-buffer the inputs only in the small-Dp memory-bound regime with a
    # real multi-step grid; otherwise keep default double buffering.
    use_deep_buffer = (dp < 256) and (n_steps > 2)
    if use_deep_buffer:
        in_spec = pl.BlockSpec((tn, dp), lambda i: (i, 0),
                               pipeline_mode=pl.Buffered(3))
    else:
        in_spec = pl.BlockSpec((tn, dp), lambda i: (i, 0))

    n_buf_actual = 3 if use_deep_buffer else 2
    vmem_bytes = fixed_bytes + 2 * n_buf_actual * tn * dp * itemsize + (4 << 20)
    vmem_bytes = int(min(max(vmem_bytes, 32 << 20), vmem_cap))

    kernel = partial(_vicreg_kernel, sim_coef=float(sim_coef),
                     std_coef=float(std_coef), cov_coef=float(cov_coef),
                     n=n, d=d, dp=dp)

    cost = pl.CostEstimate(
        flops=4 * npad * dp * dp + 8 * npad * dp,
        transcendentals=2 * dp,
        bytes_accessed=2 * npad * dp * itemsize + 4,
    )

    out = pl.pallas_call(
        kernel,
        out_shape=jax.ShapeDtypeStruct((1, 1), jnp.float32),
        grid=(n_steps,),
        in_specs=[in_spec, in_spec],
        out_specs=pl.BlockSpec(memory_space=pltpu.MemorySpace.SMEM),
        scratch_shapes=[
            pltpu.VMEM((dp, dp), jnp.float32),   # G1 = x1^T x1
            pltpu.VMEM((dp, dp), jnp.float32),   # G2 = x2^T x2
            pltpu.VMEM((8, dp), jnp.float32),    # rows: s1, s2, sum (x1-x2)^2
        ],
        compiler_params=pltpu.CompilerParams(
            dimension_semantics=("arbitrary",),   # reduction axis (scratch carried)
            vmem_limit_bytes=vmem_bytes,
        ),
        cost_estimate=cost,
    )(x1, x2)
    return out[0, 0]


def _vicreg_ref(x1, x2, sim_coef, std_coef, cov_coef):
    # Pure-JAX reference mirroring the PyTorch module.
    n, d = x1.shape
    sim = jnp.mean((x1 - x2) ** 2)
    x1c = x1 - x1.mean(0, keepdims=True)
    x2c = x2 - x2.mean(0, keepdims=True)

    def std_l(x):
        std = jnp.sqrt(jnp.sum(x * x, axis=0) / (n - 1) + 1e-4)
        return jnp.mean(jax.nn.relu(1.0 - std))

    def cov_l(x):
        cov = x.T @ x / (n - 1)
        off = cov - jnp.diag(jnp.diag(cov))
        return jnp.sum(off ** 2) / d

    std = (std_l(x1c) + std_l(x2c)) * 0.5
    cov = (cov_l(x1c) + cov_l(x2c)) * 0.5
    return sim * sim_coef + std * std_coef + cov * cov_coef


if __name__ == "__main__":
    sim_coef, std_coef, cov_coef = 25.0, 25.0, 1.0

    key = jax.random.PRNGKey(0)
    k1, k2, k3, k4 = jax.random.split(key, 4)

    # Small shape consistent with the module: (num_nodes, z_dim) = (8, 32).
    N, D = 8, 32
    x1 = jax.random.normal(k1, (N, D), dtype=jnp.float32)
    x2 = x1 + 0.1 * jax.random.normal(k2, (N, D), dtype=jnp.float32)

    loss = jax.block_until_ready(vicreg_loss(x1, x2, sim_coef, std_coef, cov_coef))
    ref = _vicreg_ref(x1, x2, sim_coef, std_coef, cov_coef)
    assert jnp.allclose(loss, ref, rtol=1e-3, atol=1e-3), (loss, ref)

    # Second check: feature padding (192 -> 256 lanes), balanced multi-step
    # grid (5 tiles of 208 rows, zero batch padding) and scratch accumulation.
    N2, D2 = 1040, 192
    y1 = jax.random.normal(k3, (N2, D2), dtype=jnp.float32)
    y2 = y1 + 0.1 * jax.random.normal(k4, (N2, D2), dtype=jnp.float32)
    loss2 = jax.block_until_ready(
        vicreg_loss(y1, y2, sim_coef, std_coef, cov_coef, tile_n=256))
    ref2 = _vicreg_ref(y1, y2, sim_coef, std_coef, cov_coef)
    assert jnp.allclose(loss2, ref2, rtol=1e-3, atol=1e-3), (loss2, ref2)

    print("KERNEL_OK")
</pallas_src>

<mosaic_0001>
module attributes {stable_mosaic.version = 11 : i64} {
  func.func @_vicreg_kernel(%arg0: i32, %arg1: memref<8x128xf32, #tpu.memory_space<vmem>>, %arg2: memref<8x128xf32, #tpu.memory_space<vmem>>, %arg3: memref<1x1xf32, #tpu.memory_space<smem>>, %arg4: memref<128x128xf32, #tpu.memory_space<vmem>>, %arg5: memref<128x128xf32, #tpu.memory_space<vmem>>, %arg6: memref<8x128xf32, #tpu.memory_space<vmem>>) attributes {dimension_semantics = [#tpu.dimension_semantics<arbitrary>], iteration_bounds = array<i64: 1>, scalar_prefetch = 0 : i64, scratch_operands = 3 : i64, tpu.core_type = #tpu.core_type<tc>, window_params = [{transform_indices = @transform_0, window_bounds = array<i64: 8, 128>}, {transform_indices = @transform_1, window_bounds = array<i64: 8, 128>}, {transform_indices = @transform_2, window_bounds = array<i64: 1, 1>}]} {
    %c0_i32 = arith.constant 0 : i32
    %0 = arith.cmpi eq, %arg0, %c0_i32 : i32
    %1 = arith.extui %0 : i1 to i32
    %c0_i32_0 = arith.constant 0 : i32
    %2 = arith.cmpi ne, %1, %c0_i32_0 : i32
    scf.if %2 {
      %cst_26 = arith.constant 0.000000e+00 : f32
      %48 = vector.broadcast %cst_26 : f32 to vector<128x128xf32>
      %c0_27 = arith.constant 0 : index
      %c0_28 = arith.constant 0 : index
      %49 = vector.load %arg4[%c0_27, %c0_28] : memref<128x128xf32, #tpu.memory_space<vmem>>, vector<128x128xf32>
      tpu.vector_store %arg4[%c0_27, %c0_28], %48 {strides = array<i32>} : memref<128x128xf32, #tpu.memory_space<vmem>>, vector<128x128xf32>,
      %cst_29 = arith.constant 0.000000e+00 : f32
      %50 = vector.broadcast %cst_29 : f32 to vector<128x128xf32>
      %c0_30 = arith.constant 0 : index
      %c0_31 = arith.constant 0 : index
      %51 = vector.load %arg5[%c0_30, %c0_31] : memref<128x128xf32, #tpu.memory_space<vmem>>, vector<128x128xf32>
      tpu.vector_store %arg5[%c0_30, %c0_31], %50 {strides = array<i32>} : memref<128x128xf32, #tpu.memory_space<vmem>>, vector<128x128xf32>,
      %cst_32 = arith.constant 0.000000e+00 : f32
      %52 = vector.broadcast %cst_32 : f32 to vector<8x128xf32>
      %c0_33 = arith.constant 0 : index
      %c0_34 = arith.constant 0 : index
      %53 = vector.load %arg6[%c0_33, %c0_34] : memref<8x128xf32, #tpu.memory_space<vmem>>, vector<8x128xf32>
      tpu.vector_store %arg6[%c0_33, %c0_34], %52 {strides = array<i32>} : memref<8x128xf32, #tpu.memory_space<vmem>>, vector<8x128xf32>,
    } else {
    }
    %c0 = arith.constant 0 : index
    %c0_1 = arith.constant 0 : index
    %3 = vector.load %arg1[%c0, %c0_1] : memref<8x128xf32, #tpu.memory_space<vmem>>, vector<8x128xf32>
    %c0_2 = arith.constant 0 : index
    %c0_3 = arith.constant 0 : index
    %4 = vector.load %arg2[%c0_2, %c0_3] : memref<8x128xf32, #tpu.memory_space<vmem>>, vector<8x128xf32>
    %5 = arith.subf %3, %4 : vector<8x128xf32>
    %cst = arith.constant dense<0.000000e+00> : vector<128xf32>
    %6 = vector.multi_reduction <add>, %3, %cst [0] : vector<8x128xf32> to vector<128xf32>
    %7 = vector.shape_cast %6 : vector<128xf32> to vector<1x128xf32>
    %cst_4 = arith.constant dense<0.000000e+00> : vector<128xf32>
    %8 = vector.multi_reduction <add>, %4, %cst_4 [0] : vector<8x128xf32> to vector<128xf32>
    %9 = vector.shape_cast %8 : vector<128xf32> to vector<1x128xf32>
    %10 = arith.mulf %5, %5 : vector<8x128xf32>
    %cst_5 = arith.constant dense<0.000000e+00> : vector<128xf32>
    %11 = vector.multi_reduction <add>, %10, %cst_5 [0] : vector<8x128xf32> to vector<128xf32>
    %12 = vector.shape_cast %11 : vector<128xf32> to vector<1x128xf32>
    %13 = tpu.iota {dimensions = array<i32: 0>} : vector<8x128xi32>
    %c0_i32_6 = arith.constant 0 : i32
    %14 = vector.broadcast %c0_i32_6 : i32 to vector<8x128xi32>
    %15 = arith.cmpi eq, %13, %14 : vector<8x128xi32>
    %cst_7 = arith.constant 0.000000e+00 : f32
    %16 = vector.shape_cast %7 : vector<1x128xf32> to vector<1x128xf32>
    %17 = vector.broadcast %16 : vector<1x128xf32> to vector<8x128xf32>
    %18 = vector.broadcast %cst_7 : f32 to vector<8x128xf32>
    %19 = arith.select %15, %17, %18 : vector<8x128xi1>, vector<8x128xf32>
    %c1_i32 = arith.constant 1 : i32
    %20 = vector.broadcast %c1_i32 : i32 to vector<8x128xi32>
    %21 = arith.cmpi eq, %13, %20 : vector<8x128xi32>
    %cst_8 = arith.constant 0.000000e+00 : f32
    %22 = vector.shape_cast %9 : vector<1x128xf32> to vector<1x128xf32>
    %23 = vector.broadcast %22 : vector<1x128xf32> to vector<8x128xf32>
    %24 = vector.broadcast %cst_8 : f32 to vector<8x128xf32>
    %25 = arith.select %21, %23, %24 : vector<8x128xi1>, vector<8x128xf32>
    %26 = arith.addf %19, %25 : vector<8x128xf32>
    %c2_i32 = arith.constant 2 : i32
    %27 = vector.broadcast %c2_i32 : i32 to vector<8x128xi32>
    %28 = arith.cmpi eq, %13, %27 : vector<8x128xi32>
    %cst_9 = arith.constant 0.000000e+00 : f32
    %29 = vector.shape_cast %12 : vector<1x128xf32> to vector<1x128xf32>
    %30 = vector.broadcast %29 : vector<1x128xf32> to vector<8x128xf32>
    %31 = vector.broadcast %cst_9 : f32 to vector<8x128xf32>
    %32 = arith.select %28, %30, %31 : vector<8x128xi1>, vector<8x128xf32>
    %33 = arith.addf %26, %32 : vector<8x128xf32>
    %c0_10 = arith.constant 0 : index
    %c0_11 = arith.constant 0 : index
    %34 = vector.load %arg6[%c0_10, %c0_11] : memref<8x128xf32, #tpu.memory_space<vmem>>, vector<8x128xf32>
    %35 = arith.addf %34, %33 : vector<8x128xf32>
    %c0_12 = arith.constant 0 : index
    %c0_13 = arith.constant 0 : index
    %36 = vector.load %arg6[%c0_12, %c0_13] : memref<8x128xf32, #tpu.memory_space<vmem>>, vector<8x128xf32>
    tpu.vector_store %arg6[%c0_12, %c0_13], %35 {strides = array<i32>} : memref<8x128xf32, #tpu.memory_space<vmem>>, vector<8x128xf32>,
    %c0_14 = arith.constant 0 : index
    %c0_15 = arith.constant 0 : index
    %37 = vector.load %arg4[%c0_14, %c0_15] : memref<128x128xf32, #tpu.memory_space<vmem>>, vector<128x128xf32>
    %cst_16 = arith.constant dense<0.000000e+00> : vector<128x128xf32>
    %38 = tpu.matmul %3, %3, %cst_16 {dimension_numbers = #tpu.dot_dimension_numbers<[0], [0], [1], [1], [0, 1, 1, 1], [], []>} : vector<8x128xf32>, vector<8x128xf32>, vector<128x128xf32> -> vector<128x128xf32>
    %39 = arith.addf %37, %38 : vector<128x128xf32>
    %c0_17 = arith.constant 0 : index
    %c0_18 = arith.constant 0 : index
    %40 = vector.load %arg4[%c0_17, %c0_18] : memref<128x128xf32, #tpu.memory_space<vmem>>, vector<128x128xf32>
    tpu.vector_store %arg4[%c0_17, %c0_18], %39 {strides = array<i32>} : memref<128x128xf32, #tpu.memory_space<vmem>>, vector<128x128xf32>,
    %c0_19 = arith.constant 0 : index
    %c0_20 = arith.constant 0 : index
    %41 = vector.load %arg5[%c0_19, %c0_20] : memref<128x128xf32, #tpu.memory_space<vmem>>, vector<128x128xf32>
    %cst_21 = arith.constant dense<0.000000e+00> : vector<128x128xf32>
    %42 = tpu.matmul %4, %4, %cst_21 {dimension_numbers = #tpu.dot_dimension_numbers<[0], [0], [1], [1], [0, 1, 1, 1], [], []>} : vector<8x128xf32>, vector<8x128xf32>, vector<128x128xf32> -> vector<128x128xf32>
    %43 = arith.addf %41, %42 : vector<128x128xf32>
    %c0_22 = arith.constant 0 : index
    %c0_23 = arith.constant 0 : index
    %44 = vector.load %arg5[%c0_22, %c0_23] : memref<128x128xf32, #tpu.memory_space<vmem>>, vector<128x128xf32>
    tpu.vector_store %arg5[%c0_22, %c0_23], %43 {strides = array<i32>} : memref<128x128xf32, #tpu.memory_space<vmem>>, vector<128x128xf32>,
    %c0_i32_24 = arith.constant 0 : i32
    %45 = arith.cmpi eq, %arg0, %c0_i32_24 : i32
    %46 = arith.extui %45 : i1 to i32
    %c0_i32_25 = arith.constant 0 : i32
    %47 = arith.cmpi ne, %46, %c0_i32_25 : i32
    scf.if %47 {
      %48 = tpu.iota {dimensions = array<i32: 1>} : vector<1x128xi32>
      %c32_i32 = arith.constant 32 : i32
      %49 = vector.broadcast %c32_i32 : i32 to vector<1x128xi32>
      %50 = arith.cmpi slt, %48, %49 : vector<1x128xi32>
      %51 = arith.extui %50 : vector<1x128xi1> to vector<1x128xi32>
      %52 = arith.sitofp %51 : vector<1x128xi32> to vector<1x128xf32>
      %53 = tpu.iota {dimensions = array<i32: 0>} : vector<128x128xi32>
      %54 = tpu.iota {dimensions = array<i32: 1>} : vector<128x128xi32>
      %c0_26 = arith.constant 0 : index
      %c0_27 = arith.constant 0 : index
      %55 = vector.load %arg6[%c0_26, %c0_27] : memref<8x128xf32, #tpu.memory_space<vmem>>, vector<1x128xf32>
      %cst_28 = arith.constant 0.000000e+00 : f32
      %56 = vector.broadcast %cst_28 : f32 to vector<1x128xf32>
      %cst_29 = arith.constant 0.000000e+00 : f32
      %57 = vector.broadcast %cst_29 : f32 to vector<1x1xf32>
      %cst_30 = arith.constant 0.000000e+00 : f32
      %58 = vector.broadcast %cst_30 : f32 to vector<1x128xf32>
      %c0_31 = arith.constant 0 : index
      %c0_32 = arith.constant 0 : index
      %59 = vector.load %arg4[%c0_31, %c0_32] : memref<128x128xf32, #tpu.memory_space<vmem>>, vector<128x128xf32>
      %c0_i32_33 = arith.constant 0 : i32
      %60 = vector.broadcast %c0_i32_33 : i32 to vector<128x128xi32>
      %61 = arith.addi %53, %60 : vector<128x128xi32>
      %62 = arith.cmpi eq, %61, %54 : vector<128x128xi32>
      %cst_34 = arith.constant 0.000000e+00 : f32
      %63 = vector.broadcast %cst_34 : f32 to vector<128x128xf32>
      %64 = arith.select %62, %59, %63 : vector<128x128xi1>, vector<128x128xf32>
      %cst_35 = arith.constant dense<0.000000e+00> : vector<128xf32>
      %65 = vector.multi_reduction <add>, %64, %cst_35 [0] : vector<128x128xf32> to vector<128xf32>
      %66 = vector.shape_cast %65 : vector<128xf32> to vector<1x128xf32>
      %67 = arith.addf %56, %66 : vector<1x128xf32>
      %68 = arith.mulf %59, %59 : vector<128x128xf32>
      %69 = vector.shape_cast %68 : vector<128x128xf32> to vector<1x128x128xf32>
      %cst_36 = arith.constant dense<0.000000e+00> : vector<1xf32>
      %70 = vector.multi_reduction <add>, %69, %cst_36 [1, 2] : vector<1x128x128xf32> to vector<1xf32>
      %71 = vector.shape_cast %70 : vector<1xf32> to vector<1x1x1xf32>
      %72 = vector.extract %71[0, 0, 0] : f32 from vector<1x1x1xf32>
      %73 = vector.broadcast %72 : f32 to vector<1x1xf32>
      %74 = arith.addf %57, %73 : vector<1x1xf32>
      %cst_37 = arith.constant dense<0.000000e+00> : vector<1x128xf32>
      %75 = tpu.matmul %55, %59, %cst_37 {dimension_numbers = #tpu.dot_dimension_numbers<[1], [0], [0], [1], [0, 0, 1, 1], [], []>} : vector<1x128xf32>, vector<128x128xf32>, vector<1x128xf32> -> vector<1x128xf32>
      %76 = arith.addf %58, %75 : vector<1x128xf32>
      %77 = arith.mulf %55, %55 : vector<1x128xf32>
      %cst_38 = arith.constant 1.250000e-01 : f32
      %78 = vector.broadcast %cst_38 : f32 to vector<1x128xf32>
      %79 = arith.mulf %77, %78 : vector<1x128xf32>
      %80 = arith.subf %67, %79 : vector<1x128xf32>
      %cst_39 = arith.constant 0.142857149 : f32
      %81 = vector.broadcast %cst_39 : f32 to vector<1x128xf32>
      %82 = arith.mulf %80, %81 : vector<1x128xf32>
      %cst_40 = arith.constant 9.99999974E-5 : f32
      %83 = vector.broadcast %cst_40 : f32 to vector<1x128xf32>
      %84 = arith.addf %82, %83 : vector<1x128xf32>
      %85 = math.sqrt %84 : vector<1x128xf32>
      %cst_41 = arith.constant 1.000000e+00 : f32
      %86 = vector.broadcast %cst_41 : f32 to vector<1x128xf32>
      %87 = arith.subf %86, %85 : vector<1x128xf32>
      %cst_42 = arith.constant 0.000000e+00 : f32
      %88 = vector.broadcast %cst_42 : f32 to vector<1x128xf32>
      %89 = arith.maximumf %87, %88 : vector<1x128xf32>
      %90 = arith.mulf %89, %52 : vector<1x128xf32>
      %91 = vector.shape_cast %90 : vector<1x128xf32> to vector<1x1x128xf32>
      %cst_43 = arith.constant dense<0.000000e+00> : vector<1xf32>
      %92 = vector.multi_reduction <add>, %91, %cst_43 [1, 2] : vector<1x1x128xf32> to vector<1xf32>
      %93 = vector.shape_cast %92 : vector<1xf32> to vector<1x1x1xf32>
      %94 = vector.extract %93[0, 0, 0] : f32 from vector<1x1x1xf32>
      %cst_44 = arith.constant 3.125000e-02 : f32
      %95 = arith.mulf %94, %cst_44 : f32
      %96 = arith.mulf %76, %55 : vector<1x128xf32>
      %97 = vector.shape_cast %96 : vector<1x128xf32> to vector<1x1x128xf32>
      %cst_45 = arith.constant dense<0.000000e+00> : vector<1xf32>
      %98 = vector.multi_reduction <add>, %97, %cst_45 [1, 2] : vector<1x1x128xf32> to vector<1xf32>
      %99 = vector.shape_cast %98 : vector<1xf32> to vector<1x1x1xf32>
      %100 = vector.extract %99[0, 0, 0] : f32 from vector<1x1x1xf32>
      %101 = arith.mulf %55, %55 : vector<1x128xf32>
      %102 = vector.shape_cast %101 : vector<1x128xf32> to vector<1x1x128xf32>
      %cst_46 = arith.constant dense<0.000000e+00> : vector<1xf32>
      %103 = vector.multi_reduction <add>, %102, %cst_46 [1, 2] : vector<1x1x128xf32> to vector<1xf32>
      %104 = vector.shape_cast %103 : vector<1xf32> to vector<1x1x1xf32>
      %105 = vector.extract %104[0, 0, 0] : f32 from vector<1x1x1xf32>
      %106 = vector.extract %74[0, 0] : f32 from vector<1x1xf32>
      %cst_47 = arith.constant 2.000000e+00 : f32
      %cst_48 = arith.constant 1.250000e-01 : f32
      %107 = arith.mulf %cst_47, %cst_48 : f32
      %108 = arith.mulf %107, %100 : f32
      %109 = arith.subf %106, %108 : f32
      %cst_49 = arith.constant 1.250000e-01 : f32
      %cst_50 = arith.constant 1.250000e-01 : f32
      %110 = arith.mulf %cst_49, %cst_50 : f32
      %111 = arith.mulf %110, %105 : f32
      %112 = arith.mulf %111, %105 : f32
      %113 = arith.addf %109, %112 : f32
      %cst_51 = arith.constant 0.142857149 : f32
      %114 = arith.mulf %113, %cst_51 : f32
      %cst_52 = arith.constant 0.142857149 : f32
      %115 = arith.mulf %114, %cst_52 : f32
      %116 = arith.mulf %82, %82 : vector<1x128xf32>
      %117 = vector.shape_cast %116 : vector<1x128xf32> to vector<1x1x128xf32>
      %cst_53 = arith.constant dense<0.000000e+00> : vector<1xf32>
      %118 = vector.multi_reduction <add>, %117, %cst_53 [1, 2] : vector<1x1x128xf32> to vector<1xf32>
      %119 = vector.shape_cast %118 : vector<1xf32> to vector<1x1x1xf32>
      %120 = vector.extract %119[0, 0, 0] : f32 from vector<1x1x1xf32>
      %121 = arith.subf %115, %120 : f32
      %cst_54 = arith.constant 3.125000e-02 : f32
      %122 = arith.mulf %121, %cst_54 : f32
      %c1 = arith.constant 1 : index
      %c0_55 = arith.constant 0 : index
      %123 = vector.load %arg6[%c1, %c0_55] : memref<8x128xf32, #tpu.memory_space<vmem>>, vector<1x128xf32>
      %cst_56 = arith.constant 0.000000e+00 : f32
      %124 = vector.broadcast %cst_56 : f32 to vector<1x128xf32>
      %cst_57 = arith.constant 0.000000e+00 : f32
      %125 = vector.broadcast %cst_57 : f32 to vector<1x1xf32>
      %cst_58 = arith.constant 0.000000e+00 : f32
      %126 = vector.broadcast %cst_58 : f32 to vector<1x128xf32>
      %c0_59 = arith.constant 0 : index
      %c0_60 = arith.constant 0 : index
      %127 = vector.load %arg5[%c0_59, %c0_60] : memref<128x128xf32, #tpu.memory_space<vmem>>, vector<128x128xf32>
      %c0_i32_61 = arith.constant 0 : i32
      %128 = vector.broadcast %c0_i32_61 : i32 to vector<128x128xi32>
      %129 = arith.addi %53, %128 : vector<128x128xi32>
      %130 = arith.cmpi eq, %129, %54 : vector<128x128xi32>
      %cst_62 = arith.constant 0.000000e+00 : f32
      %131 = vector.broadcast %cst_62 : f32 to vector<128x128xf32>
      %132 = arith.select %130, %127, %131 : vector<128x128xi1>, vector<128x128xf32>
      %cst_63 = arith.constant dense<0.000000e+00> : vector<128xf32>
      %133 = vector.multi_reduction <add>, %132, %cst_63 [0] : vector<128x128xf32> to vector<128xf32>
      %134 = vector.shape_cast %133 : vector<128xf32> to vector<1x128xf32>
      %135 = arith.addf %124, %134 : vector<1x128xf32>
      %136 = arith.mulf %127, %127 : vector<128x128xf32>
      %137 = vector.shape_cast %136 : vector<128x128xf32> to vector<1x128x128xf32>
      %cst_64 = arith.constant dense<0.000000e+00> : vector<1xf32>
      %138 = vector.multi_reduction <add>, %137, %cst_64 [1, 2] : vector<1x128x128xf32> to vector<1xf32>
      %139 = vector.shape_cast %138 : vector<1xf32> to vector<1x1x1xf32>
      %140 = vector.extract %139[0, 0, 0] : f32 from vector<1x1x1xf32>
      %141 = vector.broadcast %140 : f32 to vector<1x1xf32>
      %142 = arith.addf %125, %141 : vector<1x1xf32>
      %cst_65 = arith.constant dense<0.000000e+00> : vector<1x128xf32>
      %143 = tpu.matmul %123, %127, %cst_65 {dimension_numbers = #tpu.dot_dimension_numbers<[1], [0], [0], [1], [0, 0, 1, 1], [], []>} : vector<1x128xf32>, vector<128x128xf32>, vector<1x128xf32> -> vector<1x128xf32>
      %144 = arith.addf %126, %143 : vector<1x128xf32>
      %145 = arith.mulf %123, %123 : vector<1x128xf32>
      %cst_66 = arith.constant 1.250000e-01 : f32
      %146 = vector.broadcast %cst_66 : f32 to vector<1x128xf32>
      %147 = arith.mulf %145, %146 : vector<1x128xf32>
      %148 = arith.subf %135, %147 : vector<1x128xf32>
      %cst_67 = arith.constant 0.142857149 : f32
      %149 = vector.broadcast %cst_67 : f32 to vector<1x128xf32>
      %150 = arith.mulf %148, %149 : vector<1x128xf32>
      %cst_68 = arith.constant 9.99999974E-5 : f32
      %151 = vector.broadcast %cst_68 : f32 to vector<1x128xf32>
      %152 = arith.addf %150, %151 : vector<1x128xf32>
      %153 = math.sqrt %152 : vector<1x128xf32>
      %cst_69 = arith.constant 1.000000e+00 : f32
      %154 = vector.broadcast %cst_69 : f32 to vector<1x128xf32>
      %155 = arith.subf %154, %153 : vector<1x128xf32>
      %cst_70 = arith.constant 0.000000e+00 : f32
      %156 = vector.broadcast %cst_70 : f32 to vector<1x128xf32>
      %157 = arith.maximumf %155, %156 : vector<1x128xf32>
      %158 = arith.mulf %157, %52 : vector<1x128xf32>
      %159 = vector.shape_cast %158 : vector<1x128xf32> to vector<1x1x128xf32>
      %cst_71 = arith.constant dense<0.000000e+00> : vector<1xf32>
      %160 = vector.multi_reduction <add>, %159, %cst_71 [1, 2] : vector<1x1x128xf32> to vector<1xf32>
      %161 = vector.shape_cast %160 : vector<1xf32> to vector<1x1x1xf32>
      %162 = vector.extract %161[0, 0, 0] : f32 from vector<1x1x1xf32>
      %cst_72 = arith.constant 3.125000e-02 : f32
      %163 = arith.mulf %162, %cst_72 : f32
      %164 = arith.mulf %144, %123 : vector<1x128xf32>
      %165 = vector.shape_cast %164 : vector<1x128xf32> to vector<1x1x128xf32>
      %cst_73 = arith.constant dense<0.000000e+00> : vector<1xf32>
      %166 = vector.multi_reduction <add>, %165, %cst_73 [1, 2] : vector<1x1x128xf32> to vector<1xf32>
      %167 = vector.shape_cast %166 : vector<1xf32> to vector<1x1x1xf32>
      %168 = vector.extract %167[0, 0, 0] : f32 from vector<1x1x1xf32>
      %169 = arith.mulf %123, %123 : vector<1x128xf32>
      %170 = vector.shape_cast %169 : vector<1x128xf32> to vector<1x1x128xf32>
      %cst_74 = arith.constant dense<0.000000e+00> : vector<1xf32>
      %171 = vector.multi_reduction <add>, %170, %cst_74 [1, 2] : vector<1x1x128xf32> to vector<1xf32>
      %172 = vector.shape_cast %171 : vector<1xf32> to vector<1x1x1xf32>
      %173 = vector.extract %172[0, 0, 0] : f32 from vector<1x1x1xf32>
      %174 = vector.extract %142[0, 0] : f32 from vector<1x1xf32>
      %cst_75 = arith.constant 2.000000e+00 : f32
      %cst_76 = arith.constant 1.250000e-01 : f32
      %175 = arith.mulf %cst_75, %cst_76 : f32
      %176 = arith.mulf %175, %168 : f32
      %177 = arith.subf %174, %176 : f32
      %cst_77 = arith.constant 1.250000e-01 : f32
      %cst_78 = arith.constant 1.250000e-01 : f32
      %178 = arith.mulf %cst_77, %cst_78 : f32
      %179 = arith.mulf %178, %173 : f32
      %180 = arith.mulf %179, %173 : f32
      %181 = arith.addf %177, %180 : f32
      %cst_79 = arith.constant 0.142857149 : f32
      %182 = arith.mulf %181, %cst_79 : f32
      %cst_80 = arith.constant 0.142857149 : f32
      %183 = arith.mulf %182, %cst_80 : f32
      %184 = arith.mulf %150, %150 : vector<1x128xf32>
      %185 = vector.shape_cast %184 : vector<1x128xf32> to vector<1x1x128xf32>
      %cst_81 = arith.constant dense<0.000000e+00> : vector<1xf32>
      %186 = vector.multi_reduction <add>, %185, %cst_81 [1, 2] : vector<1x1x128xf32> to vector<1xf32>
      %187 = vector.shape_cast %186 : vector<1xf32> to vector<1x1x1xf32>
      %188 = vector.extract %187[0, 0, 0] : f32 from vector<1x1x1xf32>
      %189 = arith.subf %183, %188 : f32
      %cst_82 = arith.constant 3.125000e-02 : f32
      %190 = arith.mulf %189, %cst_82 : f32
      %c2 = arith.constant 2 : index
      %c0_83 = arith.constant 0 : index
      %191 = vector.load %arg6[%c2, %c0_83] : memref<8x128xf32, #tpu.memory_space<vmem>>, vector<1x128xf32>
      %192 = vector.shape_cast %191 : vector<1x128xf32> to vector<1x1x128xf32>
      %cst_84 = arith.constant dense<0.000000e+00> : vector<1xf32>
      %193 = vector.multi_reduction <add>, %192, %cst_84 [1, 2] : vector<1x1x128xf32> to vector<1xf32>
      %194 = vector.shape_cast %193 : vector<1xf32> to vector<1x1x1xf32>
      %195 = vector.extract %194[0, 0, 0] : f32 from vector<1x1x1xf32>
      %cst_85 = arith.constant 3.906250e-03 : f32
      %196 = arith.mulf %195, %cst_85 : f32
      %cst_86 = arith.constant 2.500000e+01 : f32
      %197 = arith.mulf %196, %cst_86 : f32
      %198 = arith.addf %95, %163 : f32
      %cst_87 = arith.constant 1.250000e+01 : f32
      %199 = arith.mulf %198, %cst_87 : f32
      %200 = arith.addf %197, %199 : f32
      %201 = arith.addf %122, %190 : f32
      %cst_88 = arith.constant 5.000000e-01 : f32
      %202 = arith.mulf %201, %cst_88 : f32
      %203 = arith.addf %200, %202 : f32
      %c0_89 = arith.constant 0 : index
      %c0_90 = arith.constant 0 : index
      %204 = memref.load %arg3[%c0_89, %c0_90] : memref<1x1xf32, #tpu.memory_space<smem>>
      memref.store %203, %arg3[%c0_89, %c0_90] : memref<1x1xf32, #tpu.memory_space<smem>>
    } else {
    }
    return
  }
  func.func @transform_0(%arg0: i32) -> (i32, i32) {
    %c0_i32 = arith.constant 0 : i32
    %c0_i32_0 = arith.constant 0 : i32
    return %arg0, %c0_i32 : i32, i32
  }
  func.func @transform_1(%arg0: i32) -> (i32, i32) {
    %c0_i32 = arith.constant 0 : i32
    %c0_i32_0 = arith.constant 0 : i32
    return %arg0, %c0_i32 : i32, i32
  }
  func.func @transform_2(%arg0: i32) -> (i32, i32) {
    %c0_i32 = arith.constant 0 : i32
    %c0_i32_0 = arith.constant 0 : i32
    %c0_i32_1 = arith.constant 0 : i32
    return %c0_i32, %c0_i32_0 : i32, i32
  }
}

</mosaic_0001>

<llo_original>
// kernel: tpu_custom_call.1
$region0: #{tpu_custom_call.1}
  #allocation0 [shape = 'u32[]', space=smem, size = 0x4, offset = 0x4, fixed_abs, tag = 'smem constant byte address 0x4 - core index']
  #allocation1 [shape = 'u32[144,128]{1,0:T(1,128)}', space=vmem, size = 0x12000, scoped, tag = 'internal scratch']
  #allocation2 [shape = 'f32[128,128]{1,0:T(8,128)}', space=vmem, size = 0x10000, scoped, tag = 'scratch operand']
  #allocation3 [shape = 'f32[128,128]{1,0:T(8,128)}', space=vmem, size = 0x10000, scoped, tag = 'scratch operand']
  #allocation4 [shape = 'f32[8,128]{1,0:T(8,128)}', space=vmem, size = 0x1000, scoped, tag = 'scratch operand']
  %s0 = inlined_call_operand.hbm [shape: f32[8,128], index: 0, kind: input, shape index: {}]
  %s1 = inlined_call_operand.hbm [shape: f32[8,128], index: 1, kind: input, shape index: {}]
  %s2 = inlined_call_operand.hbm [shape: f32[1,1], index: 2, kind: output, shape index: {}]
  %s3 = sld [smem:[#allocation0]]
  $region34: #{tpu_custom_call.1} parent=0
    _
  %s5 = ssub.s32 1, %s3
  %s6 = scalar_select 0, %s5, %s3
  $region1: #{tpu_custom_call.1} parent=0
    #allocation5 [shape = 'u8[4096]{0}', space=vmem, size = 0x1000, scoped, tag = 'input window, operand 0, single buffered']
    #allocation6 [shape = 's32[1]{0}', space=sflag, size = 0x4, scoped, tag = 'scoped memory for tpu_custom_call.1']
    #allocation7 [shape = 's32[1]{0}', space=sflag, size = 0x4, scoped, tag = 'scoped memory for tpu_custom_call.1']
    #allocation8 [shape = 'u8[4096]{0}', space=vmem, size = 0x1000, scoped, tag = 'input window, operand 1, single buffered']
    #allocation9 [shape = 's32[1]{0}', space=sflag, size = 0x4, scoped, tag = 'scoped memory for tpu_custom_call.1']
    #allocation10 [shape = 'u8[512]{0}', space=smem, size = 0x200, scoped, tag = 'output window, operand 0, single buffered']
    %7 = vsyncpa [#allocation6], 0
    %8 = vsyncpa [#allocation9], 0
    %9 = vsyncpa [#allocation7], 0
    // Predicated region
    $region2: #{tpu_custom_call.1} parent=1 // pred_check
      _
    $region3: #{tpu_custom_call.1} parent=1 // pred_check_branch
      %11 = sbr.rel (0) target = $region5
    $region4: #{tpu_custom_call.1} parent=1 // pred_region
      %s13 = ssub.s32 128, 128
      %14 = vsyncadd [#allocation6], %s13
      %s16 = sshll.u32 [#allocation5], 4
      %s17 = int_to_ptr.vmem [resolvable:$true] %s16
      %19 = dma.hbm_to_vmem [thread:$0]  %s0, 128, %s17, [#allocation6]
    $region5: #{tpu_custom_call.1} parent=1 // pred_fallthru
      _
    // Predicated region
    $region6: #{tpu_custom_call.1} parent=1 // pred_check
      _
    $region7: #{tpu_custom_call.1} parent=1 // pred_check_branch
      %21 = sbr.rel (0) target = $region9
    $region8: #{tpu_custom_call.1} parent=1 // pred_region
      %s23 = ssub.s32 128, 128
      %24 = vsyncadd [#allocation9], %s23
      %s26 = sshll.u32 [#allocation8], 4
      %s27 = int_to_ptr.vmem [resolvable:$true] %s26
      %29 = dma.hbm_to_vmem [thread:$0]  %s1, 128, %s27, [#allocation9]
    $region9: #{tpu_custom_call.1} parent=1 // pred_fallthru
      _
    // Predicated region
    $region10: #{tpu_custom_call.1} parent=1 // pred_check
      _
    $region11: #{tpu_custom_call.1} parent=1 // pred_check_branch
      %31 = sbr.rel (0) target = $region13
    $region12: #{tpu_custom_call.1} parent=1 // pred_region
      %32 = dma.done [#allocation6], 128
    $region13: #{tpu_custom_call.1} parent=1 // pred_fallthru
      _
    // Predicated region
    $region14: #{tpu_custom_call.1} parent=1 // pred_check
      _
    $region15: #{tpu_custom_call.1} parent=1 // pred_check_branch
      %34 = sbr.rel (0) target = $region17
    $region16: #{tpu_custom_call.1} parent=1 // pred_region
      %35 = dma.done [#allocation9], 128
    $region17: #{tpu_custom_call.1} parent=1 // pred_fallthru
      _
    %p36 = scmp.eq.s32.totalorder 0, 0
    // Predicated region
    $region18: #{tpu_custom_call.1} parent=1 // pred_check
      %p37 = pneg %p36
    $region19: #{tpu_custom_call.1} parent=1 // pred_check_branch
      %39 = sbr.rel (%p37) target = $region21
    $region20: #{tpu_custom_call.1} parent=1 // pred_region
      %40 = vst [vmem:[#allocation2] sm:$0xff] 0.0
      %41 = vst [vmem:[#allocation2 + $0x8] sm:$0xff] 0.0
      %42 = vst [vmem:[#allocation2 + $0x10] sm:$0xff] 0.0
      %43 = vst [vmem:[#allocation2 + $0x18] sm:$0xff] 0.0
      %44 = vst [vmem:[#allocation2 + $0x20] sm:$0xff] 0.0
      %45 = vst [vmem:[#allocation2 + $0x28] sm:$0xff] 0.0
      %46 = vst [vmem:[#allocation2 + $0x30] sm:$0xff] 0.0
      %47 = vst [vmem:[#allocation2 + $0x38] sm:$0xff] 0.0
      %48 = vst [vmem:[#allocation2 + $0x40] sm:$0xff] 0.0
      %49 = vst [vmem:[#allocation2 + $0x48] sm:$0xff] 0.0
      %50 = vst [vmem:[#allocation2 + $0x50] sm:$0xff] 0.0
      %51 = vst [vmem:[#allocation2 + $0x58] sm:$0xff] 0.0
      %52 = vst [vmem:[#allocation2 + $0x60] sm:$0xff] 0.0
      %53 = vst [vmem:[#allocation2 + $0x68] sm:$0xff] 0.0
      %54 = vst [vmem:[#allocation2 + $0x70] sm:$0xff] 0.0
      %55 = vst [vmem:[#allocation2 + $0x78] sm:$0xff] 0.0
      %56 = vst [vmem:[#allocation3] sm:$0xff] 0.0
      %57 = vst [vmem:[#allocation3 + $0x8] sm:$0xff] 0.0
      %58 = vst [vmem:[#allocation3 + $0x10] sm:$0xff] 0.0
      %59 = vst [vmem:[#allocation3 + $0x18] sm:$0xff] 0.0
      %60 = vst [vmem:[#allocation3 + $0x20] sm:$0xff] 0.0
      %61 = vst [vmem:[#allocation3 + $0x28] sm:$0xff] 0.0
      %62 = vst [vmem:[#allocation3 + $0x30] sm:$0xff] 0.0
      %63 = vst [vmem:[#allocation3 + $0x38] sm:$0xff] 0.0
      %64 = vst [vmem:[#allocation3 + $0x40] sm:$0xff] 0.0
      %65 = vst [vmem:[#allocation3 + $0x48] sm:$0xff] 0.0
      %66 = vst [vmem:[#allocation3 + $0x50] sm:$0xff] 0.0
      %67 = vst [vmem:[#allocation3 + $0x58] sm:$0xff] 0.0
      %68 = vst [vmem:[#allocation3 + $0x60] sm:$0xff] 0.0
      %69 = vst [vmem:[#allocation3 + $0x68] sm:$0xff] 0.0
      %70 = vst [vmem:[#allocation3 + $0x70] sm:$0xff] 0.0
      %71 = vst [vmem:[#allocation3 + $0x78] sm:$0xff] 0.0
      %72 = vst [vmem:[#allocation4] sm:$0xff] 0.0
    $region21: #{tpu_custom_call.1} parent=1 // pred_fallthru
      _
    %v73 = vld [vmem:[#allocation5] sm:$0xff]
    %v74 = vld [vmem:[#allocation8] sm:$0xff]
    %v75 = vsub.f32 %v73, %v74
    %v76 = vrot.slane %v73, 4
    %v77 = vadd.f32 %v73, %v76
    %v78 = vrot.slane %v77, 2
    %v79 = vadd.f32 %v77, %v78
    %v80 = vrot.slane %v79, 1
    %v81 = vadd.f32 %v79, %v80
    %v82 = vrot.slane %v74, 4
    %v83 = vadd.f32 %v74, %v82
    %v84 = vrot.slane %v83, 2
    %v85 = vadd.f32 %v83, %v84
    %v86 = vrot.slane %v85, 1
    %v87 = vadd.f32 %v85, %v86
    %v88 = vmul.f32 %v75, %v75
    %v89 = vrot.slane %v88, 4
    %v90 = vadd.f32 %v88, %v89
    %v91 = vrot.slane %v90, 2
    %v92 = vadd.f32 %v90, %v91
    %v93 = vrot.slane %v92, 1
    %v94 = vadd.f32 %v92, %v93
    %v95 = vlaneseq
    %v96 = vshrl.u32 %v95, 7
    %vm97 = vcmp.eq.s32.totalorder %v96, 0
    %v98 = vsel %vm97, %v81, 0.0
    %vm99 = vcmp.eq.s32.totalorder %v96, 1
    %v100 = vsel %vm99, %v87, 0.0
    %v101 = vadd.f32 %v98, %v100
    %vm102 = vcmp.eq.s32.totalorder %v96, 2
    %v103 = vsel %vm102, %v94, 0.0
    %v104 = vadd.f32 %v101, %v103
    %v105 = vld [vmem:[#allocation4] sm:$0xff]
    %v106 = vadd.f32 %v105, %v104
    %107 = vst [vmem:[#allocation4] sm:$0xff] %v106
    %v108 = vld [vmem:[#allocation2] sm:$0xff]
    %v109 = vld [vmem:[#allocation2 + $0x8] sm:$0xff]
    %v110 = vld [vmem:[#allocation2 + $0x10] sm:$0xff]
    %v111 = vld [vmem:[#allocation2 + $0x18] sm:$0xff]
    %v112 = vld [vmem:[#allocation2 + $0x20] sm:$0xff]
    %v113 = vld [vmem:[#allocation2 + $0x28] sm:$0xff]
    %v114 = vld [vmem:[#allocation2 + $0x30] sm:$0xff]
    %v115 = vld [vmem:[#allocation2 + $0x38] sm:$0xff]
    %v116 = vld [vmem:[#allocation2 + $0x40] sm:$0xff]
    %v117 = vld [vmem:[#allocation2 + $0x48] sm:$0xff]
    %v118 = vld [vmem:[#allocation2 + $0x50] sm:$0xff]
    %v119 = vld [vmem:[#allocation2 + $0x58] sm:$0xff]
    %v120 = vld [vmem:[#allocation2 + $0x60] sm:$0xff]
    %v121 = vld [vmem:[#allocation2 + $0x68] sm:$0xff]
    %v122 = vld [vmem:[#allocation2 + $0x70] sm:$0xff]
    %v123 = vld [vmem:[#allocation2 + $0x78] sm:$0xff]
    %124 = vxpose.xlu0.b32.start [1/16] %v73, 128
    %125 = vxpose.xlu0.b32.cont [2/16] 0.0, 128
    %126 = vxpose.xlu0.b32.cont [3/16] 0.0, 128
    %127 = vxpose.xlu0.b32.cont [4/16] 0.0, 128
    %128 = vxpose.xlu0.b32.cont [5/16] 0.0, 128
    %129 = vxpose.xlu0.b32.cont [6/16] 0.0, 128
    %130 = vxpose.xlu0.b32.cont [7/16] 0.0, 128
    %131 = vxpose.xlu0.b32.cont [8/16] 0.0, 128
    %132 = vxpose.xlu0.b32.cont [9/16] 0.0, 128
    %133 = vxpose.xlu0.b32.cont [10/16] 0.0, 128
    %134 = vxpose.xlu0.b32.cont [11/16] 0.0, 128
    %135 = vxpose.xlu0.b32.cont [12/16] 0.0, 128
    %136 = vxpose.xlu0.b32.cont [13/16] 0.0, 128
    %137 = vxpose.xlu0.b32.cont [14/16] 0.0, 128
    %138 = vxpose.xlu0.b32.cont [15/16] 0.0, 128
    %139 = vxpose.xlu0.b32.end [16/16] 0.0, 128
    %v140 = vpop.trf.xlu0
    %v141 = vpop.trf.xlu0
    %v142 = vpop.trf.xlu0
    %v143 = vpop.trf.xlu0
    %v144 = vpop.trf.xlu0
    %v145 = vpop.trf.xlu0
    %v146 = vpop.trf.xlu0
    %v147 = vpop.trf.xlu0
    %v148 = vpop.trf.xlu0
    %v149 = vpop.trf.xlu0
    %v150 = vpop.trf.xlu0
    %v151 = vpop.trf.xlu0
    %v152 = vpop.trf.xlu0
    %v153 = vpop.trf.xlu0
    %v154 = vpop.trf.xlu0
    %v155 = vpop.trf.xlu0
    %vm156 = vcmask 64512
    %v158 = vsel %vm156, %v140, 0
    %v161 = vsel %vm156, %v141, 0
    %v164 = vsel %vm156, %v142, 0
    %v167 = vsel %vm156, %v143, 0
    %v170 = vsel %vm156, %v144, 0
    %v173 = vsel %vm156, %v145, 0
    %v176 = vsel %vm156, %v146, 0
    %v179 = vsel %vm156, %v147, 0
    %v182 = vsel %vm156, %v148, 0
    %v185 = vsel %vm156, %v149, 0
    %v188 = vsel %vm156, %v150, 0
    %v191 = vsel %vm156, %v151, 0
    %v194 = vsel %vm156, %v152, 0
    %v197 = vsel %vm156, %v153, 0
    %v200 = vsel %vm156, %v154, 0
    %v203 = vsel %vm156, %v155, 0
    %205 = vmatprep.subr.mxu0 0.0
    %206 = vmatpush1.msra.mxu0 %v73
    %207 = vmatprep.subr.mxu0 0.0
    %208 = vmatpush1.msra.mxu0 0.0
    %209 = vmatprep.subr.mxu0 0.0
    %210 = vmatpush1.msra.mxu0 0.0
    %211 = vmatprep.subr.mxu0 0.0
    %212 = vmatpush1.msra.mxu0 0.0
    %213 = vmatprep.subr.mxu0 0.0
    %214 = vmatpush1.msra.mxu0 0.0
    %215 = vmatprep.subr.mxu0 0.0
    %216 = vmatpush1.msra.mxu0 0.0
    %217 = vmatprep.subr.mxu0 0.0
    %218 = vmatpush1.msra.mxu0 0.0
    %219 = vmatprep.subr.mxu0 0.0
    %220 = vmatpush1.msra.mxu0 0.0
    %221 = vmatprep.subr.mxu0 0.0
    %222 = vmatpush1.msra.mxu0 0.0
    %223 = vmatprep.subr.mxu0 0.0
    %224 = vmatpush1.msra.mxu0 0.0
    %225 = vmatprep.subr.mxu0 0.0
    %226 = vmatpush1.msra.mxu0 0.0
    %227 = vmatprep.subr.mxu0 0.0
    %228 = vmatpush1.msra.mxu0 0.0
    %229 = vmatprep.subr.mxu0 0.0
    %230 = vmatpush1.msra.mxu0 0.0
    %231 = vmatprep.subr.mxu0 0.0
    %232 = vmatpush1.msra.mxu0 0.0
    %233 = vmatprep.subr.mxu0 0.0
    %234 = vmatpush1.msra.mxu0 0.0
    %235 = vmatprep.subr.mxu0 0.0
    %236 = vmatpush1.msra.mxu0 0.0
    %237 = vmatprep.subr.mxu0 0.0
    %238 = vmatpush1.msra.mxu0 0.0
    %239 = vmatprep.subr.mxu0 0.0
    %240 = vmatpush1.msra.mxu0 0.0
    %241 = vmatprep.subr.mxu0 0.0
    %242 = vmatpush1.msra.mxu0 0.0
    %243 = vmatprep.subr.mxu0 0.0
    %244 = vmatpush1.msra.mxu0 0.0
    %245 = vmatprep.subr.mxu0 0.0
    %246 = vmatpush1.msra.mxu0 0.0
    %247 = vmatprep.subr.mxu0 0.0
    %248 = vmatpush1.msra.mxu0 0.0
    %249 = vmatprep.subr.mxu0 0.0
    %250 = vmatpush1.msra.mxu0 0.0
    %251 = vmatprep.subr.mxu0 0.0
    %252 = vmatpush1.msra.mxu0 0.0
    %253 = vmatprep.subr.mxu0 0.0
    %254 = vmatpush1.msra.mxu0 0.0
    %255 = vmatprep.subr.mxu0 0.0
    %256 = vmatpush1.msra.mxu0 0.0
    %257 = vmatprep.subr.mxu0 0.0
    %258 = vmatpush1.msra.mxu0 0.0
    %259 = vmatprep.subr.mxu0 0.0
    %260 = vmatpush1.msra.mxu0 0.0
    %261 = vmatprep.subr.mxu0 0.0
    %262 = vmatpush1.msra.mxu0 0.0
    %263 = vmatprep.subr.mxu0 0.0
    %264 = vmatpush1.msra.mxu0 0.0
    %265 = vmatprep.subr.mxu0 0.0
    %266 = vmatpush1.msra.mxu0 0.0
    %267 = vmatprep.subr.mxu0 0.0
    %268 = vmatpush1.msra.mxu0 0.0
    %269 = vmatprep.mubr.f32.mxu0 0.0
    %270 = vmatmul.mubr.f32.gmra.mrb[0].mxu0 %v158
    %v271 = vpop.f32.mrb[0].mxu0
    %v272 = vadd.f32 0.0, %v271
    %v273 = vpop.f32.mrb[0].mxu0
    %274 = vmatprep.mubr.f32.mxu0 0.0
    %275 = vmatmul.mubr.f32.gmra.mrb[0].mxu0 %v161
    %v276 = vpop.f32.mrb[0].mxu0
    %v277 = vadd.f32 0.0, %v276
    %v278 = vpop.f32.mrb[0].mxu0
    %279 = vmatprep.mubr.f32.mxu0 0.0
    %280 = vmatmul.mubr.f32.gmra.mrb[0].mxu0 %v164
    %v281 = vpop.f32.mrb[0].mxu0
    %v282 = vadd.f32 0.0, %v281
    %v283 = vpop.f32.mrb[0].mxu0
    %284 = vmatprep.mubr.f32.mxu0 0.0
    %285 = vmatmul.mubr.f32.gmra.mrb[0].mxu0 %v167
    %v286 = vpop.f32.mrb[0].mxu0
    %v287 = vadd.f32 0.0, %v286
    %v288 = vpop.f32.mrb[0].mxu0
    %289 = vmatprep.mubr.f32.mxu0 0.0
    %290 = vmatmul.mubr.f32.gmra.mrb[0].mxu0 %v170
    %v291 = vpop.f32.mrb[0].mxu0
    %v292 = vadd.f32 0.0, %v291
    %v293 = vpop.f32.mrb[0].mxu0
    %294 = vmatprep.mubr.f32.mxu0 0.0
    %295 = vmatmul.mubr.f32.gmra.mrb[0].mxu0 %v173
    %v296 = vpop.f32.mrb[0].mxu0
    %v297 = vadd.f32 0.0, %v296
    %v298 = vpop.f32.mrb[0].mxu0
    %299 = vmatprep.mubr.f32.mxu0 0.0
    %300 = vmatmul.mubr.f32.gmra.mrb[0].mxu0 %v176
    %v301 = vpop.f32.mrb[0].mxu0
    %v302 = vadd.f32 0.0, %v301
    %v303 = vpop.f32.mrb[0].mxu0
    %304 = vmatprep.mubr.f32.mxu0 0.0
    %305 = vmatmul.mubr.f32.gmra.mrb[0].mxu0 %v179
    %v306 = vpop.f32.mrb[0].mxu0
    %v307 = vadd.f32 0.0, %v306
    %v308 = vpop.f32.mrb[0].mxu0
    %309 = vmatprep.mubr.f32.mxu0 0.0
    %310 = vmatmul.mubr.f32.gmra.mrb[0].mxu0 %v182
    %v311 = vpop.f32.mrb[0].mxu0
    %v312 = vadd.f32 0.0, %v311
    %v313 = vpop.f32.mrb[0].mxu0
    %314 = vmatprep.mubr.f32.mxu0 0.0
    %315 = vmatmul.mubr.f32.gmra.mrb[0].mxu0 %v185
    %v316 = vpop.f32.mrb[0].mxu0
    %v317 = vadd.f32 0.0, %v316
    %v318 = vpop.f32.mrb[0].mxu0
    %319 = vmatprep.mubr.f32.mxu0 0.0
    %320 = vmatmul.mubr.f32.gmra.mrb[0].mxu0 %v188
    %v321 = vpop.f32.mrb[0].mxu0
    %v322 = vadd.f32 0.0, %v321
    %v323 = vpop.f32.mrb[0].mxu0
    %324 = vmatprep.mubr.f32.mxu0 0.0
    %325 = vmatmul.mubr.f32.gmra.mrb[0].mxu0 %v191
    %v326 = vpop.f32.mrb[0].mxu0
    %v327 = vadd.f32 0.0, %v326
    %v328 = vpop.f32.mrb[0].mxu0
    %329 = vmatprep.mubr.f32.mxu0 0.0
    %330 = vmatmul.mubr.f32.gmra.mrb[0].mxu0 %v194
    %v331 = vpop.f32.mrb[0].mxu0
    %v332 = vadd.f32 0.0, %v331
    %v333 = vpop.f32.mrb[0].mxu0
    %334 = vmatprep.mubr.f32.mxu0 0.0
    %335 = vmatmul.mubr.f32.gmra.mrb[0].mxu0 %v197
    %v336 = vpop.f32.mrb[0].mxu0
    %v337 = vadd.f32 0.0, %v336
    %v338 = vpop.f32.mrb[0].mxu0
    %339 = vmatprep.mubr.f32.mxu0 0.0
    %340 = vmatmul.mubr.f32.gmra.mrb[0].mxu0 %v200
    %v341 = vpop.f32.mrb[0].mxu0
    %v342 = vadd.f32 0.0, %v341
    %v343 = vpop.f32.mrb[0].mxu0
    %344 = vmatprep.mubr.f32.mxu0 0.0
    %345 = vmatmul.mubr.f32.gmra.mrb[0].mxu0 %v203
    %v346 = vpop.f32.mrb[0].mxu0
    %v347 = vadd.f32 0.0, %v346
    %v348 = vpop.f32.mrb[0].mxu0
    %349 = vdwg.mxu0
    %v350 = vadd.f32 %v108, %v272
    %v351 = vadd.f32 %v109, %v277
    %v352 = vadd.f32 %v110, %v282
    %v353 = vadd.f32 %v111, %v287
    %v354 = vadd.f32 %v112, %v292
    %v355 = vadd.f32 %v113, %v297
    %v356 = vadd.f32 %v114, %v302
    %v357 = vadd.f32 %v115, %v307
    %v358 = vadd.f32 %v116, %v312
    %v359 = vadd.f32 %v117, %v317
    %v360 = vadd.f32 %v118, %v322
    %v361 = vadd.f32 %v119, %v327
    %v362 = vadd.f32 %v120, %v332
    %v363 = vadd.f32 %v121, %v337
    %v364 = vadd.f32 %v122, %v342
    %v365 = vadd.f32 %v123, %v347
    %366 = vst [vmem:[#allocation2] sm:$0xff] %v350
    %367 = vst [vmem:[#allocation2 + $0x8] sm:$0xff] %v351
    %368 = vst [vmem:[#allocation2 + $0x10] sm:$0xff] %v352
    %369 = vst [vmem:[#allocation2 + $0x18] sm:$0xff] %v353
    %370 = vst [vmem:[#allocation2 + $0x20] sm:$0xff] %v354
    %371 = vst [vmem:[#allocation2 + $0x28] sm:$0xff] %v355
    %372 = vst [vmem:[#allocation2 + $0x30] sm:$0xff] %v356
    %373 = vst [vmem:[#allocation2 + $0x38] sm:$0xff] %v357
    %374 = vst [vmem:[#allocation2 + $0x40] sm:$0xff] %v358
    %375 = vst [vmem:[#allocation2 + $0x48] sm:$0xff] %v359
    %376 = vst [vmem:[#allocation2 + $0x50] sm:$0xff] %v360
    %377 = vst [vmem:[#allocation2 + $0x58] sm:$0xff] %v361
    %378 = vst [vmem:[#allocation2 + $0x60] sm:$0xff] %v362
    %379 = vst [vmem:[#allocation2 + $0x68] sm:$0xff] %v363
    %380 = vst [vmem:[#allocation2 + $0x70] sm:$0xff] %v364
    %381 = vst [vmem:[#allocation2 + $0x78] sm:$0xff] %v365
    %v382 = vld [vmem:[#allocation3] sm:$0xff]
    %v383 = vld [vmem:[#allocation3 + $0x8] sm:$0xff]
    %v384 = vld [vmem:[#allocation3 + $0x10] sm:$0xff]
    %v385 = vld [vmem:[#allocation3 + $0x18] sm:$0xff]
    %v386 = vld [vmem:[#allocation3 + $0x20] sm:$0xff]
    %v387 = vld [vmem:[#allocation3 + $0x28] sm:$0xff]
    %v388 = vld [vmem:[#allocation3 + $0x30] sm:$0xff]
    %v389 = vld [vmem:[#allocation3 + $0x38] sm:$0xff]
    %v390 = vld [vmem:[#allocation3 + $0x40] sm:$0xff]
    %v391 = vld [vmem:[#allocation3 + $0x48] sm:$0xff]
    %v392 = vld [vmem:[#allocation3 + $0x50] sm:$0xff]
    %v393 = vld [vmem:[#allocation3 + $0x58] sm:$0xff]
    %v394 = vld [vmem:[#allocation3 + $0x60] sm:$0xff]
    %v395 = vld [vmem:[#allocation3 + $0x68] sm:$0xff]
    %v396 = vld [vmem:[#allocation3 + $0x70] sm:$0xff]
    %v397 = vld [vmem:[#allocation3 + $0x78] sm:$0xff]
    %398 = vxpose.xlu0.b32.start [1/16] %v74, 128
    %399 = vxpose.xlu0.b32.cont [2/16] 0.0, 128
    %400 = vxpose.xlu0.b32.cont [3/16] 0.0, 128
    %401 = vxpose.xlu0.b32.cont [4/16] 0.0, 128
    %402 = vxpose.xlu0.b32.cont [5/16] 0.0, 128
    %403 = vxpose.xlu0.b32.cont [6/16] 0.0, 128
    %404 = vxpose.xlu0.b32.cont [7/16] 0.0, 128
    %405 = vxpose.xlu0.b32.cont [8/16] 0.0, 128
    %406 = vxpose.xlu0.b32.cont [9/16] 0.0, 128
    %407 = vxpose.xlu0.b32.cont [10/16] 0.0, 128
    %408 = vxpose.xlu0.b32.cont [11/16] 0.0, 128
    %409 = vxpose.xlu0.b32.cont [12/16] 0.0, 128
    %410 = vxpose.xlu0.b32.cont [13/16] 0.0, 128
    %411 = vxpose.xlu0.b32.cont [14/16] 0.0, 128
    %412 = vxpose.xlu0.b32.cont [15/16] 0.0, 128
    %413 = vxpose.xlu0.b32.end [16/16] 0.0, 128
    %v414 = vpop.trf.xlu0
    %v415 = vpop.trf.xlu0
    %v416 = vpop.trf.xlu0
    %v417 = vpop.trf.xlu0
    %v418 = vpop.trf.xlu0
    %v419 = vpop.trf.xlu0
    %v420 = vpop.trf.xlu0
    %v421 = vpop.trf.xlu0
    %v422 = vpop.trf.xlu0
    %v423 = vpop.trf.xlu0
    %v424 = vpop.trf.xlu0
    %v425 = vpop.trf.xlu0
    %v426 = vpop.trf.xlu0
    %v427 = vpop.trf.xlu0
    %v428 = vpop.trf.xlu0
    %v429 = vpop.trf.xlu0
    %v431 = vsel %vm156, %v414, 0
    %v434 = vsel %vm156, %v415, 0
    %v437 = vsel %vm156, %v416, 0
    %v440 = vsel %vm156, %v417, 0
    %v443 = vsel %vm156, %v418, 0
    %v446 = vsel %vm156, %v419, 0
    %v449 = vsel %vm156, %v420, 0
    %v452 = vsel %vm156, %v421, 0
    %v455 = vsel %vm156, %v422, 0
    %v458 = vsel %vm156, %v423, 0
    %v461 = vsel %vm156, %v424, 0
    %v464 = vsel %vm156, %v425, 0
    %v467 = vsel %vm156, %v426, 0
    %v470 = vsel %vm156, %v427, 0
    %v473 = vsel %vm156, %v428, 0
    %v476 = vsel %vm156, %v429, 0
    %478 = vmatprep.subr.mxu0 0.0
    %479 = vmatpush1.msra.mxu0 %v74
    %480 = vmatprep.subr.mxu0 0.0
    %481 = vmatpush1.msra.mxu0 0.0
    %482 = vmatprep.subr.mxu0 0.0
    %483 = vmatpush1.msra.mxu0 0.0
    %484 = vmatprep.subr.mxu0 0.0
    %485 = vmatpush1.msra.mxu0 0.0
    %486 = vmatprep.subr.mxu0 0.0
    %487 = vmatpush1.msra.mxu0 0.0
    %488 = vmatprep.subr.mxu0 0.0
    %489 = vmatpush1.msra.mxu0 0.0
    %490 = vmatprep.subr.mxu0 0.0
    %491 = vmatpush1.msra.mxu0 0.0
    %492 = vmatprep.subr.mxu0 0.0
    %493 = vmatpush1.msra.mxu0 0.0
    %494 = vmatprep.subr.mxu0 0.0
    %495 = vmatpush1.msra.mxu0 0.0
    %496 = vmatprep.subr.mxu0 0.0
    %497 = vmatpush1.msra.mxu0 0.0
    %498 = vmatprep.subr.mxu0 0.0
    %499 = vmatpush1.msra.mxu0 0.0
    %500 = vmatprep.subr.mxu0 0.0
    %501 = vmatpush1.msra.mxu0 0.0
    %502 = vmatprep.subr.mxu0 0.0
    %503 = vmatpush1.msra.mxu0 0.0
    %504 = vmatprep.subr.mxu0 0.0
    %505 = vmatpush1.msra.mxu0 0.0
    %506 = vmatprep.subr.mxu0 0.0
    %507 = vmatpush1.msra.mxu0 0.0
    %508 = vmatprep.subr.mxu0 0.0
    %509 = vmatpush1.msra.mxu0 0.0
    %510 = vmatprep.subr.mxu0 0.0
    %511 = vmatpush1.msra.mxu0 0.0
    %512 = vmatprep.subr.mxu0 0.0
    %513 = vmatpush1.msra.mxu0 0.0
    %514 = vmatprep.subr.mxu0 0.0
    %515 = vmatpush1.msra.mxu0 0.0
    %516 = vmatprep.subr.mxu0 0.0
    %517 = vmatpush1.msra.mxu0 0.0
    %518 = vmatprep.subr.mxu0 0.0
    %519 = vmatpush1.msra.mxu0 0.0
    %520 = vmatprep.subr.mxu0 0.0
    %521 = vmatpush1.msra.mxu0 0.0
    %522 = vmatprep.subr.mxu0 0.0
    %523 = vmatpush1.msra.mxu0 0.0
    %524 = vmatprep.subr.mxu0 0.0
    %525 = vmatpush1.msra.mxu0 0.0
    %526 = vmatprep.subr.mxu0 0.0
    %527 = vmatpush1.msra.mxu0 0.0
    %528 = vmatprep.subr.mxu0 0.0
    %529 = vmatpush1.msra.mxu0 0.0
    %530 = vmatprep.subr.mxu0 0.0
    %531 = vmatpush1.msra.mxu0 0.0
    %532 = vmatprep.subr.mxu0 0.0
    %533 = vmatpush1.msra.mxu0 0.0
    %534 = vmatprep.subr.mxu0 0.0
    %535 = vmatpush1.msra.mxu0 0.0
    %536 = vmatprep.subr.mxu0 0.0
    %537 = vmatpush1.msra.mxu0 0.0
    %538 = vmatprep.subr.mxu0 0.0
    %539 = vmatpush1.msra.mxu0 0.0
    %540 = vmatprep.subr.mxu0 0.0
    %541 = vmatpush1.msra.mxu0 0.0
    %542 = vmatprep.mubr.f32.mxu0 0.0
    %543 = vmatmul.mubr.f32.gmra.mrb[0].mxu0 %v431
    %v544 = vpop.f32.mrb[0].mxu0
    %v545 = vadd.f32 0.0, %v544
    %v546 = vpop.f32.mrb[0].mxu0
    %547 = vmatprep.mubr.f32.mxu0 0.0
    %548 = vmatmul.mubr.f32.gmra.mrb[0].mxu0 %v434
    %v549 = vpop.f32.mrb[0].mxu0
    %v550 = vadd.f32 0.0, %v549
    %v551 = vpop.f32.mrb[0].mxu0
    %552 = vmatprep.mubr.f32.mxu0 0.0
    %553 = vmatmul.mubr.f32.gmra.mrb[0].mxu0 %v437
    %v554 = vpop.f32.mrb[0].mxu0
    %v555 = vadd.f32 0.0, %v554
    %v556 = vpop.f32.mrb[0].mxu0
    %557 = vmatprep.mubr.f32.mxu0 0.0
    %558 = vmatmul.mubr.f32.gmra.mrb[0].mxu0 %v440
    %v559 = vpop.f32.mrb[0].mxu0
    %v560 = vadd.f32 0.0, %v559
    %v561 = vpop.f32.mrb[0].mxu0
    %562 = vmatprep.mubr.f32.mxu0 0.0
    %563 = vmatmul.mubr.f32.gmra.mrb[0].mxu0 %v443
    %v564 = vpop.f32.mrb[0].mxu0
    %v565 = vadd.f32 0.0, %v564
    %v566 = vpop.f32.mrb[0].mxu0
    %567 = vmatprep.mubr.f32.mxu0 0.0
    %568 = vmatmul.mubr.f32.gmra.mrb[0].mxu0 %v446
    %v569 = vpop.f32.mrb[0].mxu0
    %v570 = vadd.f32 0.0, %v569
    %v571 = vpop.f32.mrb[0].mxu0
    %572 = vmatprep.mubr.f32.mxu0 0.0
    %573 = vmatmul.mubr.f32.gmra.mrb[0].mxu0 %v449
    %v574 = vpop.f32.mrb[0].mxu0
    %v575 = vadd.f32 0.0, %v574
    %v576 = vpop.f32.mrb[0].mxu0
    %577 = vmatprep.mubr.f32.mxu0 0.0
    %578 = vmatmul.mubr.f32.gmra.mrb[0].mxu0 %v452
    %v579 = vpop.f32.mrb[0].mxu0
    %v580 = vadd.f32 0.0, %v579
    %v581 = vpop.f32.mrb[0].mxu0
    %582 = vmatprep.mubr.f32.mxu0 0.0
    %583 = vmatmul.mubr.f32.gmra.mrb[0].mxu0 %v455
    %v584 = vpop.f32.mrb[0].mxu0
    %v585 = vadd.f32 0.0, %v584
    %v586 = vpop.f32.mrb[0].mxu0
    %587 = vmatprep.mubr.f32.mxu0 0.0
    %588 = vmatmul.mubr.f32.gmra.mrb[0].mxu0 %v458
    %v589 = vpop.f32.mrb[0].mxu0
    %v590 = vadd.f32 0.0, %v589
    %v591 = vpop.f32.mrb[0].mxu0
    %592 = vmatprep.mubr.f32.mxu0 0.0
    %593 = vmatmul.mubr.f32.gmra.mrb[0].mxu0 %v461
    %v594 = vpop.f32.mrb[0].mxu0
    %v595 = vadd.f32 0.0, %v594
    %v596 = vpop.f32.mrb[0].mxu0
    %597 = vmatprep.mubr.f32.mxu0 0.0
    %598 = vmatmul.mubr.f32.gmra.mrb[0].mxu0 %v464
    %v599 = vpop.f32.mrb[0].mxu0
    %v600 = vadd.f32 0.0, %v599
    %v601 = vpop.f32.mrb[0].mxu0
    %602 = vmatprep.mubr.f32.mxu0 0.0
    %603 = vmatmul.mubr.f32.gmra.mrb[0].mxu0 %v467
    %v604 = vpop.f32.mrb[0].mxu0
    %v605 = vadd.f32 0.0, %v604
    %v606 = vpop.f32.mrb[0].mxu0
    %607 = vmatprep.mubr.f32.mxu0 0.0
    %608 = vmatmul.mubr.f32.gmra.mrb[0].mxu0 %v470
    %v609 = vpop.f32.mrb[0].mxu0
    %v610 = vadd.f32 0.0, %v609
    %v611 = vpop.f32.mrb[0].mxu0
    %612 = vmatprep.mubr.f32.mxu0 0.0
    %613 = vmatmul.mubr.f32.gmra.mrb[0].mxu0 %v473
    %v614 = vpop.f32.mrb[0].mxu0
    %v615 = vadd.f32 0.0, %v614
    %v616 = vpop.f32.mrb[0].mxu0
    %617 = vmatprep.mubr.f32.mxu0 0.0
    %618 = vmatmul.mubr.f32.gmra.mrb[0].mxu0 %v476
    %v619 = vpop.f32.mrb[0].mxu0
    %v620 = vadd.f32 0.0, %v619
    %v621 = vpop.f32.mrb[0].mxu0
    %622 = vdwg.mxu0
    %v623 = vadd.f32 %v382, %v545
    %v624 = vadd.f32 %v383, %v550
    %v625 = vadd.f32 %v384, %v555
    %v626 = vadd.f32 %v385, %v560
    %v627 = vadd.f32 %v386, %v565
    %v628 = vadd.f32 %v387, %v570
    %v629 = vadd.f32 %v388, %v575
    %v630 = vadd.f32 %v389, %v580
    %v631 = vadd.f32 %v390, %v585
    %v632 = vadd.f32 %v391, %v590
    %v633 = vadd.f32 %v392, %v595
    %v634 = vadd.f32 %v393, %v600
    %v635 = vadd.f32 %v394, %v605
    %v636 = vadd.f32 %v395, %v610
    %v637 = vadd.f32 %v396, %v615
    %v638 = vadd.f32 %v397, %v620
    %639 = vst [vmem:[#allocation3] sm:$0xff] %v623
    %640 = vst [vmem:[#allocation3 + $0x8] sm:$0xff] %v624
    %641 = vst [vmem:[#allocation3 + $0x10] sm:$0xff] %v625
    %642 = vst [vmem:[#allocation3 + $0x18] sm:$0xff] %v626
    %643 = vst [vmem:[#allocation3 + $0x20] sm:$0xff] %v627
    %644 = vst [vmem:[#allocation3 + $0x28] sm:$0xff] %v628
    %645 = vst [vmem:[#allocation3 + $0x30] sm:$0xff] %v629
    %646 = vst [vmem:[#allocation3 + $0x38] sm:$0xff] %v630
    %647 = vst [vmem:[#allocation3 + $0x40] sm:$0xff] %v631
    %648 = vst [vmem:[#allocation3 + $0x48] sm:$0xff] %v632
    %649 = vst [vmem:[#allocation3 + $0x50] sm:$0xff] %v633
    %650 = vst [vmem:[#allocation3 + $0x58] sm:$0xff] %v634
    %651 = vst [vmem:[#allocation3 + $0x60] sm:$0xff] %v635
    %652 = vst [vmem:[#allocation3 + $0x68] sm:$0xff] %v636
    %653 = vst [vmem:[#allocation3 + $0x70] sm:$0xff] %v637
    %654 = vst [vmem:[#allocation3 + $0x78] sm:$0xff] %v638
    // Predicated region
    $region22: #{tpu_custom_call.1} parent=1 // pred_check
      %p655 = pneg %p36
    $region23: #{tpu_custom_call.1} parent=1 // pred_check_branch
      %657 = sbr.rel (%p655) target = $region25
    $region24: #{tpu_custom_call.1} parent=1 // pred_region
      %v658 = vlaneseq
      %v659 = vand.u32 %v658, 127
      %vm660 = vcmp.lt.s32.totalorder %v659, 32
      %v661 = vsel %vm660, 1, 0
      %v662 = vcvt.s32.f32 %v661
      %v663 = vadd.s32 %v96, 8
      %v664 = vadd.s32 %v96, 16
      %v665 = vadd.s32 %v96, 24
      %v666 = vadd.s32 %v96, 32
      %v667 = vadd.s32 %v96, 40
      %v668 = vadd.s32 %v96, 48
      %v669 = vadd.s32 %v96, 56
      %v670 = vadd.s32 %v96, 64
      %v671 = vadd.s32 %v96, 72
      %v672 = vadd.s32 %v96, 80
      %v673 = vadd.s32 %v96, 88
      %v674 = vadd.s32 %v96, 96
      %v675 = vadd.s32 %v96, 104
      %v676 = vadd.s32 %v96, 112
      %v677 = vadd.s32 %v96, 120
      %v678 = vld [vmem:[#allocation4] sm:$0x1]
      %v679 = vld [vmem:[#allocation2] sm:$0xff]
      %v680 = vld [vmem:[#allocation2 + $0x8] sm:$0xff]
      %v681 = vld [vmem:[#allocation2 + $0x10] sm:$0xff]
      %v682 = vld [vmem:[#allocation2 + $0x18] sm:$0xff]
      %v683 = vld [vmem:[#allocation2 + $0x20] sm:$0xff]
      %v684 = vld [vmem:[#allocation2 + $0x28] sm:$0xff]
      %v685 = vld [vmem:[#allocation2 + $0x30] sm:$0xff]
      %v686 = vld [vmem:[#allocation2 + $0x38] sm:$0xff]
      %v687 = vld [vmem:[#allocation2 + $0x40] sm:$0xff]
      %v688 = vld [vmem:[#allocation2 + $0x48] sm:$0xff]
      %v689 = vld [vmem:[#allocation2 + $0x50] sm:$0xff]
      %v690 = vld [vmem:[#allocation2 + $0x58] sm:$0xff]
      %v691 = vld [vmem:[#allocation2 + $0x60] sm:$0xff]
      %v692 = vld [vmem:[#allocation2 + $0x68] sm:$0xff]
      %v693 = vld [vmem:[#allocation2 + $0x70] sm:$0xff]
      %v694 = vld [vmem:[#allocation2 + $0x78] sm:$0xff]
      %vm695 = vcmp.eq.s32.totalorder %v96, %v659
      %vm696 = vcmp.eq.s32.totalorder %v663, %v659
      %vm697 = vcmp.eq.s32.totalorder %v664, %v659
      %vm698 = vcmp.eq.s32.totalorder %v665, %v659
      %vm699 = vcmp.eq.s32.totalorder %v666, %v659
      %vm700 = vcmp.eq.s32.totalorder %v667, %v659
      %vm701 = vcmp.eq.s32.totalorder %v668, %v659
      %vm702 = vcmp.eq.s32.totalorder %v669, %v659
      %vm703 = vcmp.eq.s32.totalorder %v670, %v659
      %vm704 = vcmp.eq.s32.totalorder %v671, %v659
      %vm705 = vcmp.eq.s32.totalorder %v672, %v659
      %vm706 = vcmp.eq.s32.totalorder %v673, %v659
      %vm707 = vcmp.eq.s32.totalorder %v674, %v659
      %vm708 = vcmp.eq.s32.totalorder %v675, %v659
      %vm709 = vcmp.eq.s32.totalorder %v676, %v659
      %vm710 = vcmp.eq.s32.totalorder %v677, %v659
      %v711 = vsel %vm695, %v679, 0.0
      %v712 = vsel %vm696, %v680, 0.0
      %v713 = vsel %vm697, %v681, 0.0
      %v714 = vsel %vm698, %v682, 0.0
      %v715 = vsel %vm699, %v683, 0.0
      %v716 = vsel %vm700, %v684, 0.0
      %v717 = vsel %vm701, %v685, 0.0
      %v718 = vsel %vm702, %v686, 0.0
      %v719 = vsel %vm703, %v687, 0.0
      %v720 = vsel %vm704, %v688, 0.0
      %v721 = vsel %vm705, %v689, 0.0
      %v722 = vsel %vm706, %v690, 0.0
      %v723 = vsel %vm707, %v691, 0.0
      %v724 = vsel %vm708, %v692, 0.0
      %v725 = vsel %vm709, %v693, 0.0
      %v726 = vsel %vm710, %v694, 0.0
      %v727 = vadd.f32 %v711, %v712
      %v728 = vadd.f32 %v727, %v713
      %v729 = vadd.f32 %v728, %v714
      %v730 = vadd.f32 %v729, %v715
      %v731 = vadd.f32 %v730, %v716
      %v732 = vadd.f32 %v731, %v717
      %v733 = vadd.f32 %v732, %v718
      %v734 = vadd.f32 %v733, %v719
      %v735 = vadd.f32 %v734, %v720
      %v736 = vadd.f32 %v735, %v721
      %v737 = vadd.f32 %v736, %v722
      %v738 = vadd.f32 %v737, %v723
      %v739 = vadd.f32 %v738, %v724
      %v740 = vadd.f32 %v739, %v725
      %v741 = vadd.f32 %v740, %v726
      %v742 = vrot.slane %v741, 4
      %v743 = vadd.f32 %v741, %v742
      %v744 = vrot.slane %v743, 2
      %v745 = vadd.f32 %v743, %v744
      %v746 = vrot.slane %v745, 1
      %v747 = vadd.f32 %v745, %v746
      %v748 = vadd.f32 %v747, 0.0
      %v749 = vmul.f32 %v679, %v679
      %v750 = vmul.f32 %v680, %v680
      %v751 = vmul.f32 %v681, %v681
      %v752 = vmul.f32 %v682, %v682
      %v753 = vmul.f32 %v683, %v683
      %v754 = vmul.f32 %v684, %v684
      %v755 = vmul.f32 %v685, %v685
      %v756 = vmul.f32 %v686, %v686
      %v757 = vmul.f32 %v687, %v687
      %v758 = vmul.f32 %v688, %v688
      %v759 = vmul.f32 %v689, %v689
      %v760 = vmul.f32 %v690, %v690
      %v761 = vmul.f32 %v691, %v691
      %v762 = vmul.f32 %v692, %v692
      %v763 = vmul.f32 %v693, %v693
      %v764 = vmul.f32 %v694, %v694
      %v765 = vadd.f32 %v749, %v750
      %v766 = vadd.f32 %v765, %v751
      %v767 = vadd.f32 %v766, %v752
      %v768 = vadd.f32 %v767, %v753
      %v769 = vadd.f32 %v768, %v754
      %v770 = vadd.f32 %v769, %v755
      %v771 = vadd.f32 %v770, %v756
      %v772 = vadd.f32 %v771, %v757
      %v773 = vadd.f32 %v772, %v758
      %v774 = vadd.f32 %v773, %v759
      %v775 = vadd.f32 %v774, %v760
      %v776 = vadd.f32 %v775, %v761
      %v777 = vadd.f32 %v776, %v762
      %v778 = vadd.f32 %v777, %v763
      %v779 = vadd.f32 %v778, %v764
      %780 = vadd.xlane.f32.xlu0 %v779
      %v781 = vpop.xlane.xlu0 %780
      %v782 = vrot.slane %v781, 4
      %v783 = vadd.f32 %v781, %v782
      %v784 = vrot.slane %v783, 2
      %v785 = vadd.f32 %v783, %v784
      %v786 = vrot.slane %v785, 1
      %v787 = vadd.f32 %v785, %v786
      %s788 = vtos %v787
      %v789 = vstv %s788
      %v790 = vadd.f32 %v789, 0.0
      %791 = vmatprep.subr.mxu0 0.0
      %792 = vmatpush1.msra.mxu0 %v679
      %793 = vmatprep.subr.mxu0 0.0
      %794 = vmatpush1.msra.mxu0 %v680
      %795 = vmatprep.subr.mxu0 0.0
      %796 = vmatpush1.msra.mxu0 %v681
      %797 = vmatprep.subr.mxu0 0.0
      %798 = vmatpush1.msra.mxu0 %v682
      %799 = vmatprep.subr.mxu0 0.0
      %800 = vmatpush1.msra.mxu0 %v683
      %801 = vmatprep.subr.mxu0 0.0
      %802 = vmatpush1.msra.mxu0 %v684
      %803 = vmatprep.subr.mxu0 0.0
      %804 = vmatpush1.msra.mxu0 %v685
      %805 = vmatprep.subr.mxu0 0.0
      %806 = vmatpush1.msra.mxu0 %v686
      %807 = vmatprep.subr.mxu0 0.0
      %808 = vmatpush1.msra.mxu0 %v687
      %809 = vmatprep.subr.mxu0 0.0
      %810 = vmatpush1.msra.mxu0 %v688
      %811 = vmatprep.subr.mxu0 0.0
      %812 = vmatpush1.msra.mxu0 %v689
      %813 = vmatprep.subr.mxu0 0.0
      %814 = vmatpush1.msra.mxu0 %v690
      %815 = vmatprep.subr.mxu0 0.0
      %816 = vmatpush1.msra.mxu0 %v691
      %817 = vmatprep.subr.mxu0 0.0
      %818 = vmatpush1.msra.mxu0 %v692
      %819 = vmatprep.subr.mxu0 0.0
      %820 = vmatpush1.msra.mxu0 %v693
      %821 = vmatprep.subr.mxu0 0.0
      %822 = vmatpush1.msra.mxu0 %v694
      %823 = vmatprep.subr.mxu0 0.0
      %824 = vmatpush1.msra.mxu0 0.0
      %825 = vmatprep.subr.mxu0 0.0
      %826 = vmatpush1.msra.mxu0 0.0
      %827 = vmatprep.subr.mxu0 0.0
      %828 = vmatpush1.msra.mxu0 0.0
      %829 = vmatprep.subr.mxu0 0.0
      %830 = vmatpush1.msra.mxu0 0.0
      %831 = vmatprep.subr.mxu0 0.0
      %832 = vmatpush1.msra.mxu0 0.0
      %833 = vmatprep.subr.mxu0 0.0
      %834 = vmatpush1.msra.mxu0 0.0
      %835 = vmatprep.subr.mxu0 0.0
      %836 = vmatpush1.msra.mxu0 0.0
      %837 = vmatprep.subr.mxu0 0.0
      %838 = vmatpush1.msra.mxu0 0.0
      %839 = vmatprep.subr.mxu0 0.0
      %840 = vmatpush1.msra.mxu0 0.0
      %841 = vmatprep.subr.mxu0 0.0
      %842 = vmatpush1.msra.mxu0 0.0
      %843 = vmatprep.subr.mxu0 0.0
      %844 = vmatpush1.msra.mxu0 0.0
      %845 = vmatprep.subr.mxu0 0.0
      %846 = vmatpush1.msra.mxu0 0.0
      %847 = vmatprep.subr.mxu0 0.0
      %848 = vmatpush1.msra.mxu0 0.0
      %849 = vmatprep.subr.mxu0 0.0
      %850 = vmatpush1.msra.mxu0 0.0
      %851 = vmatprep.subr.mxu0 0.0
      %852 = vmatpush1.msra.mxu0 0.0
      %853 = vmatprep.subr.mxu0 0.0
      %854 = vmatpush1.msra.mxu0 0.0
      %855 = vmatprep.mubr.f32.mxu0 0.0
      %856 = vmatmul.mubr.f32.gmra.mrb[0].mxu0 %v678
      %v857 = vpop.f32.mrb[0].mxu0
      %v858 = vadd.f32 0.0, %v857
      %v859 = vpop.f32.mrb[0].mxu0
      %860 = vdwg.mxu0
      %v861 = vmul.f32 %v678, %v678
      %v862 = vmul.f32 %v861, 0.125
      %v863 = vsub.f32 %v748, %v862
      %v864 = vmul.f32 %v863, 0.14285715
      %v865 = vadd.f32 %v864, 0.0001
      %v866 = vrsqrt.pop %v865
      %v867 = vmul.f32 %v865, %v866
      %vm868 = vcmp.eq.f32.partialorder %v865, inf
      %v869 = vsel %vm868, %v865, %v867
      %vm870 = vcmp.eq.f32.partialorder %v865, 0.0
      %v871 = vand.u32 %v865, 2147483648
      %v872 = vsel %vm870, %v871, %v869
      %v873 = vsub.f32 1.0, %v872
      %v874 = vmax.f32 %v873, 0.0
      %v875 = vmul.f32 %v874, %v662
      %vm876 = vcmask 1040384
      %v877 = vsel %vm876, %v875, 0.0
      %878 = vadd.xlane.f32.xlu0 %v877
      %v879 = vpop.xlane.xlu0 %878
      %v880 = vrot.slane %v879, 4
      %v881 = vadd.f32 %v879, %v880
      %v882 = vrot.slane %v881, 2
      %v883 = vadd.f32 %v881, %v882
      %v884 = vrot.slane %v883, 1
      %v885 = vadd.f32 %v883, %v884
      %s886 = vtos %v885
      %s887 = smul.f32 %s886, 0.03125
      %v888 = vmul.f32 %v858, %v678
      %v889 = vsel %vm876, %v888, 0.0
      %890 = vadd.xlane.f32.xlu0 %v889
      %v891 = vpop.xlane.xlu0 %890
      %v892 = vrot.slane %v891, 4
      %v893 = vadd.f32 %v891, %v892
      %v894 = vrot.slane %v893, 2
      %v895 = vadd.f32 %v893, %v894
      %v896 = vrot.slane %v895, 1
      %v897 = vadd.f32 %v895, %v896
      %s898 = vtos %v897
      %v899 = vsel %vm876, %v861, 0.0
      %900 = vadd.xlane.f32.xlu0 %v899
      %v901 = vpop.xlane.xlu0 %900
      %v902 = vrot.slane %v901, 4
      %v903 = vadd.f32 %v901, %v902
      %v904 = vrot.slane %v903, 2
      %v905 = vadd.f32 %v903, %v904
      %v906 = vrot.slane %v905, 1
      %v907 = vadd.f32 %v905, %v906
      %s908 = vtos %v907
      %s909 = vtos %v790
      %s910 = smul.f32 %s898, 0.25
      %s911 = ssub.f32 %s909, %s910
      %s912 = smul.f32 %s908, 0.015625
      %s913 = smul.f32 %s912, %s908
      %s914 = sadd.f32 %s911, %s913
      %s915 = smul.f32 %s914, 0.14285715
      %s916 = smul.f32 %s915, 0.14285715
      %v917 = vmul.f32 %v864, %v864
      %v918 = vsel %vm876, %v917, 0.0
      %919 = vadd.xlane.f32.xlu0 %v918
      %v920 = vpop.xlane.xlu0 %919
      %v921 = vrot.slane %v920, 4
      %v922 = vadd.f32 %v920, %v921
      %v923 = vrot.slane %v922, 2
      %v924 = vadd.f32 %v922, %v923
      %v925 = vrot.slane %v924, 1
      %v926 = vadd.f32 %v924, %v925
      %s927 = vtos %v926
      %s928 = ssub.f32 %s916, %s927
      %s929 = smul.f32 %s928, 0.03125
      %v930 = vld [vmem:[#allocation4 + $0x1] sm:$0x1]
      %v931 = vld [vmem:[#allocation3] sm:$0xff]
      %v932 = vld [vmem:[#allocation3 + $0x8] sm:$0xff]
      %v933 = vld [vmem:[#allocation3 + $0x10] sm:$0xff]
      %v934 = vld [vmem:[#allocation3 + $0x18] sm:$0xff]
      %v935 = vld [vmem:[#allocation3 + $0x20] sm:$0xff]
      %v936 = vld [vmem:[#allocation3 + $0x28] sm:$0xff]
      %v937 = vld [vmem:[#allocation3 + $0x30] sm:$0xff]
      %v938 = vld [vmem:[#allocation3 + $0x38] sm:$0xff]
      %v939 = vld [vmem:[#allocation3 + $0x40] sm:$0xff]
      %v940 = vld [vmem:[#allocation3 + $0x48] sm:$0xff]
      %v941 = vld [vmem:[#allocation3 + $0x50] sm:$0xff]
      %v942 = vld [vmem:[#allocation3 + $0x58] sm:$0xff]
      %v943 = vld [vmem:[#allocation3 + $0x60] sm:$0xff]
      %v944 = vld [vmem:[#allocation3 + $0x68] sm:$0xff]
      %v945 = vld [vmem:[#allocation3 + $0x70] sm:$0xff]
      %v946 = vld [vmem:[#allocation3 + $0x78] sm:$0xff]
      %v947 = vsel %vm695, %v931, 0.0
      %v948 = vsel %vm696, %v932, 0.0
      %v949 = vsel %vm697, %v933, 0.0
      %v950 = vsel %vm698, %v934, 0.0
      %v951 = vsel %vm699, %v935, 0.0
      %v952 = vsel %vm700, %v936, 0.0
      %v953 = vsel %vm701, %v937, 0.0
      %v954 = vsel %vm702, %v938, 0.0
      %v955 = vsel %vm703, %v939, 0.0
      %v956 = vsel %vm704, %v940, 0.0
      %v957 = vsel %vm705, %v941, 0.0
      %v958 = vsel %vm706, %v942, 0.0
      %v959 = vsel %vm707, %v943, 0.0
      %v960 = vsel %vm708, %v944, 0.0
      %v961 = vsel %vm709, %v945, 0.0
      %v962 = vsel %vm710, %v946, 0.0
      %v963 = vadd.f32 %v947, %v948
      %v964 = vadd.f32 %v963, %v949
      %v965 = vadd.f32 %v964, %v950
      %v966 = vadd.f32 %v965, %v951
      %v967 = vadd.f32 %v966, %v952
      %v968 = vadd.f32 %v967, %v953
      %v969 = vadd.f32 %v968, %v954
      %v970 = vadd.f32 %v969, %v955
      %v971 = vadd.f32 %v970, %v956
      %v972 = vadd.f32 %v971, %v957
      %v973 = vadd.f32 %v972, %v958
      %v974 = vadd.f32 %v973, %v959
      %v975 = vadd.f32 %v974, %v960
      %v976 = vadd.f32 %v975, %v961
      %v977 = vadd.f32 %v976, %v962
      %v978 = vrot.slane %v977, 4
      %v979 = vadd.f32 %v977, %v978
      %v980 = vrot.slane %v979, 2
      %v981 = vadd.f32 %v979, %v980
      %v982 = vrot.slane %v981, 1
      %v983 = vadd.f32 %v981, %v982
      %v984 = vadd.f32 %v983, 0.0
      %v985 = vmul.f32 %v931, %v931
      %v986 = vmul.f32 %v932, %v932
      %v987 = vmul.f32 %v933, %v933
      %v988 = vmul.f32 %v934, %v934
      %v989 = vmul.f32 %v935, %v935
      %v990 = vmul.f32 %v936, %v936
      %v991 = vmul.f32 %v937, %v937
      %v992 = vmul.f32 %v938, %v938
      %v993 = vmul.f32 %v939, %v939
      %v994 = vmul.f32 %v940, %v940
      %v995 = vmul.f32 %v941, %v941
      %v996 = vmul.f32 %v942, %v942
      %v997 = vmul.f32 %v943, %v943
      %v998 = vmul.f32 %v944, %v944
      %v999 = vmul.f32 %v945, %v945
      %v1000 = vmul.f32 %v946, %v946
      %v1001 = vadd.f32 %v985, %v986
      %v1002 = vadd.f32 %v1001, %v987
      %v1003 = vadd.f32 %v1002, %v988
      %v1004 = vadd.f32 %v1003, %v989
      %v1005 = vadd.f32 %v1004, %v990
      %v1006 = vadd.f32 %v1005, %v991
      %v1007 = vadd.f32 %v1006, %v992
      %v1008 = vadd.f32 %v1007, %v993
      %v1009 = vadd.f32 %v1008, %v994
      %v1010 = vadd.f32 %v1009, %v995
      %v1011 = vadd.f32 %v1010, %v996
      %v1012 = vadd.f32 %v1011, %v997
      %v1013 = vadd.f32 %v1012, %v998
      %v1014 = vadd.f32 %v1013, %v999
      %v1015 = vadd.f32 %v1014, %v1000
      %1016 = vadd.xlane.f32.xlu0 %v1015
      %v1017 = vpop.xlane.xlu0 %1016
      %v1018 = vrot.slane %v1017, 4
      %v1019 = vadd.f32 %v1017, %v1018
      %v1020 = vrot.slane %v1019, 2
      %v1021 = vadd.f32 %v1019, %v1020
      %v1022 = vrot.slane %v1021, 1
      %v1023 = vadd.f32 %v1021, %v1022
      %s1024 = vtos %v1023
      %v1025 = vstv %s1024
      %v1026 = vadd.f32 %v1025, 0.0
      %1027 = vmatprep.subr.mxu0 0.0
      %1028 = vmatpush1.msra.mxu0 %v931
      %1029 = vmatprep.subr.mxu0 0.0
      %1030 = vmatpush1.msra.mxu0 %v932
      %1031 = vmatprep.subr.mxu0 0.0
      %1032 = vmatpush1.msra.mxu0 %v933
      %1033 = vmatprep.subr.mxu0 0.0
      %1034 = vmatpush1.msra.mxu0 %v934
      %1035 = vmatprep.subr.mxu0 0.0
      %1036 = vmatpush1.msra.mxu0 %v935
      %1037 = vmatprep.subr.mxu0 0.0
      %1038 = vmatpush1.msra.mxu0 %v936
      %1039 = vmatprep.subr.mxu0 0.0
      %1040 = vmatpush1.msra.mxu0 %v937
      %1041 = vmatprep.subr.mxu0 0.0
      %1042 = vmatpush1.msra.mxu0 %v938
      %1043 = vmatprep.subr.mxu0 0.0
      %1044 = vmatpush1.msra.mxu0 %v939
      %1045 = vmatprep.subr.mxu0 0.0
      %1046 = vmatpush1.msra.mxu0 %v940
      %1047 = vmatprep.subr.mxu0 0.0
      %1048 = vmatpush1.msra.mxu0 %v941
      %1049 = vmatprep.subr.mxu0 0.0
      %1050 = vmatpush1.msra.mxu0 %v942
      %1051 = vmatprep.subr.mxu0 0.0
      %1052 = vmatpush1.msra.mxu0 %v943
      %1053 = vmatprep.subr.mxu0 0.0
      %1054 = vmatpush1.msra.mxu0 %v944
      %1055 = vmatprep.subr.mxu0 0.0
      %1056 = vmatpush1.msra.mxu0 %v945
      %1057 = vmatprep.subr.mxu0 0.0
      %1058 = vmatpush1.msra.mxu0 %v946
      %1059 = vmatprep.subr.mxu0 0.0
      %1060 = vmatpush1.msra.mxu0 0.0
      %1061 = vmatprep.subr.mxu0 0.0
      %1062 = vmatpush1.msra.mxu0 0.0
      %1063 = vmatprep.subr.mxu0 0.0
      %1064 = vmatpush1.msra.mxu0 0.0
      %1065 = vmatprep.subr.mxu0 0.0
      %1066 = vmatpush1.msra.mxu0 0.0
      %1067 = vmatprep.subr.mxu0 0.0
      %1068 = vmatpush1.msra.mxu0 0.0
      %1069 = vmatprep.subr.mxu0 0.0
      %1070 = vmatpush1.msra.mxu0 0.0
      %1071 = vmatprep.subr.mxu0 0.0
      %1072 = vmatpush1.msra.mxu0 0.0
      %1073 = vmatprep.subr.mxu0 0.0
      %1074 = vmatpush1.msra.mxu0 0.0
      %1075 = vmatprep.subr.mxu0 0.0
      %1076 = vmatpush1.msra.mxu0 0.0
      %1077 = vmatprep.subr.mxu0 0.0
      %1078 = vmatpush1.msra.mxu0 0.0
      %1079 = vmatprep.subr.mxu0 0.0
      %1080 = vmatpush1.msra.mxu0 0.0
      %1081 = vmatprep.subr.mxu0 0.0
      %1082 = vmatpush1.msra.mxu0 0.0
      %1083 = vmatprep.subr.mxu0 0.0
      %1084 = vmatpush1.msra.mxu0 0.0
      %1085 = vmatprep.subr.mxu0 0.0
      %1086 = vmatpush1.msra.mxu0 0.0
      %1087 = vmatprep.subr.mxu0 0.0
      %1088 = vmatpush1.msra.mxu0 0.0
      %1089 = vmatprep.subr.mxu0 0.0
      %1090 = vmatpush1.msra.mxu0 0.0
      %1091 = vmatprep.mubr.f32.mxu0 0.0
      %1092 = vmatmul.mubr.f32.gmra.mrb[0].mxu0 %v930
      %v1093 = vpop.f32.mrb[0].mxu0
      %v1094 = vadd.f32 0.0, %v1093
      %v1095 = vpop.f32.mrb[0].mxu0
      %1096 = vdwg.mxu0
      %v1097 = vmul.f32 %v930, %v930
      %v1098 = vmul.f32 %v1097, 0.125
      %v1099 = vsub.f32 %v984, %v1098
      %v1100 = vmul.f32 %v1099, 0.14285715
      %v1101 = vadd.f32 %v1100, 0.0001
      %v1102 = vrsqrt.pop %v1101
      %v1103 = vmul.f32 %v1101, %v1102
      %vm1104 = vcmp.eq.f32.partialorder %v1101, inf
      %v1105 = vsel %vm1104, %v1101, %v1103
      %vm1106 = vcmp.eq.f32.partialorder %v1101, 0.0
      %v1107 = vand.u32 %v1101, 2147483648
      %v1108 = vsel %vm1106, %v1107, %v1105
      %v1109 = vsub.f32 1.0, %v1108
      %v1110 = vmax.f32 %v1109, 0.0
      %v1111 = vmul.f32 %v1110, %v662
      %v1112 = vsel %vm876, %v1111, 0.0
      %1113 = vadd.xlane.f32.xlu0 %v1112
      %v1114 = vpop.xlane.xlu0 %1113
      %v1115 = vrot.slane %v1114, 4
      %v1116 = vadd.f32 %v1114, %v1115
      %v1117 = vrot.slane %v1116, 2
      %v1118 = vadd.f32 %v1116, %v1117
      %v1119 = vrot.slane %v1118, 1
      %v1120 = vadd.f32 %v1118, %v1119
      %s1121 = vtos %v1120
      %s1122 = smul.f32 %s1121, 0.03125
      %v1123 = vmul.f32 %v1094, %v930
      %v1124 = vsel %vm876, %v1123, 0.0
      %1125 = vadd.xlane.f32.xlu0 %v1124
      %v1126 = vpop.xlane.xlu0 %1125
      %v1127 = vrot.slane %v1126, 4
      %v1128 = vadd.f32 %v1126, %v1127
      %v1129 = vrot.slane %v1128, 2
      %v1130 = vadd.f32 %v1128, %v1129
      %v1131 = vrot.slane %v1130, 1
      %v1132 = vadd.f32 %v1130, %v1131
      %s1133 = vtos %v1132
      %v1134 = vsel %vm876, %v1097, 0.0
      %1135 = vadd.xlane.f32.xlu0 %v1134
      %v1136 = vpop.xlane.xlu0 %1135
      %v1137 = vrot.slane %v1136, 4
      %v1138 = vadd.f32 %v1136, %v1137
      %v1139 = vrot.slane %v1138, 2
      %v1140 = vadd.f32 %v1138, %v1139
      %v1141 = vrot.slane %v1140, 1
      %v1142 = vadd.f32 %v1140, %v1141
      %s1143 = vtos %v1142
      %s1144 = vtos %v1026
      %s1145 = smul.f32 %s1133, 0.25
      %s1146 = ssub.f32 %s1144, %s1145
      %s1147 = smul.f32 %s1143, 0.015625
      %s1148 = smul.f32 %s1147, %s1143
      %s1149 = sadd.f32 %s1146, %s1148
      %s1150 = smul.f32 %s1149, 0.14285715
      %s1151 = smul.f32 %s1150, 0.14285715
      %v1152 = vmul.f32 %v1100, %v1100
      %v1153 = vsel %vm876, %v1152, 0.0
      %1154 = vadd.xlane.f32.xlu0 %v1153
      %v1155 = vpop.xlane.xlu0 %1154
      %v1156 = vrot.slane %v1155, 4
      %v1157 = vadd.f32 %v1155, %v1156
      %v1158 = vrot.slane %v1157, 2
      %v1159 = vadd.f32 %v1157, %v1158
      %v1160 = vrot.slane %v1159, 1
      %v1161 = vadd.f32 %v1159, %v1160
      %s1162 = vtos %v1161
      %s1163 = ssub.f32 %s1151, %s1162
      %s1164 = smul.f32 %s1163, 0.03125
      %v1165 = vld [vmem:[#allocation4 + $0x2] sm:$0x1]
      %v1166 = vsel %vm876, %v1165, 0.0
      %1167 = vadd.xlane.f32.xlu0 %v1166
      %v1168 = vpop.xlane.xlu0 %1167
      %v1169 = vrot.slane %v1168, 4
      %v1170 = vadd.f32 %v1168, %v1169
      %v1171 = vrot.slane %v1170, 2
      %v1172 = vadd.f32 %v1170, %v1171
      %v1173 = vrot.slane %v1172, 1
      %v1174 = vadd.f32 %v1172, %v1173
      %s1175 = vtos %v1174
      %s1176 = smul.f32 %s1175, 0.00390625
      %s1177 = smul.f32 %s1176, 25.0
      %s1178 = sadd.f32 %s887, %s1122
      %s1179 = smul.f32 %s1178, 12.5
      %s1180 = sadd.f32 %s1177, %s1179
      %s1181 = sadd.f32 %s929, %s1164
      %s1182 = smul.f32 %s1181, 0.5
      %s1183 = sadd.f32 %s1180, %s1182
      %s1184 = scalar_lea.smem [#allocation10], 0
      %1185 = sst [smem:[%s1184]] %s1183
    $region25: #{tpu_custom_call.1} parent=1 // pred_fallthru
      _
    // Predicated region
    $region26: #{tpu_custom_call.1} parent=1 // pred_check
      _
    $region27: #{tpu_custom_call.1} parent=1 // pred_check_branch
      %1187 = sbr.rel (0) target = $region29
    $region28: #{tpu_custom_call.1} parent=1 // pred_region
      %s1189 = ssub.s32 16, 16
      %1190 = vsyncadd [#allocation7], %s1189
      %1193 = dma.smem_to_hbm [#allocation10], 16, %s2, [#allocation7]
    $region29: #{tpu_custom_call.1} parent=1 // pred_fallthru
      _
    // Predicated region
    $region30: #{tpu_custom_call.1} parent=1 // pred_check
      _
    $region31: #{tpu_custom_call.1} parent=1 // pred_check_branch
      %1195 = sbr.rel (0) target = $region33
    $region32: #{tpu_custom_call.1} parent=1 // pred_region
      %1196 = dma.done [#allocation7], 16
    $region33: #{tpu_custom_call.1} parent=1 // pred_fallthru
      _
    %1197 = sfence
    %1198 = vsyncpa [#allocation6], 1
    %1199 = vsyncpa [#allocation9], 1
    %1200 = vsyncpa [#allocation7], 1

</llo_original>
